<compile_context>
chip_gen: v7x
topology: tpu7x:2x2x1
jax: 0.10.0
libtpu: 0.0.40
codegen_flags: <defaults>
</compile_context>

<pallas_src>
import math

import jax
import jax.numpy as jnp
from jax.experimental import pallas as pl
from jax.experimental.pallas import tpu as pltpu


_GELU_K = math.sqrt(2.0 / math.pi)

# "single" or "double": which weight-buffering path the last mlp_forward call used.
_weight_buffering_used = None


def _round_up(x, m):
    return (x + m - 1) // m * m


def _gelu_new(x):
    # GPT-2 "new" gelu (tanh approximation), matches transformer_lens gelu_new.
    # Op-trimmed: compute x*x once, reuse x for the outer product.
    x2 = x * x
    t = jnp.tanh(_GELU_K * x * (1.0 + 0.044715 * x2))
    return 0.5 * x * (1.0 + t)


def _vmem_limit_bytes():
    # Raise the scoped VMEM limit above the 32 MiB default, leaving headroom below
    # physical capacity (128 MiB on v5e/v6e, 64 MiB per TC on v7x).
    cap = 64 * 1024 * 1024
    try:
        cap = pltpu.get_tpu_info().vmem_capacity_bytes
    except Exception:
        pass
    return int(min(cap - (8 << 20), 112 << 20))


def _tm_max_for_chip():
    # v5e/v6e (128 MiB VMEM): tm up to 512 amortizes the ~0.35us per-step overhead.
    # v7x (64 MiB/TC): keep 256 so resident weights + intermediates + 2-TC sharding fit.
    try:
        cap = pltpu.get_tpu_info().vmem_capacity_bytes
        return 512 if cap >= (100 << 20) else 256
    except Exception:
        return 256


def _choose_tm(M, tm_max):
    """Row tile: multiple of 16 (bf16 sublane packing), derived from M so the tail
    tile wastes little MXU work, with >=2 (even) grid steps when M allows so that
    dimension_semantics=("parallel",) actually shards across v7x's two TensorCores."""
    m16 = _round_up(max(M, 1), 16)
    n = pl.cdiv(m16, tm_max)
    if m16 >= 32:
        n = max(n, 2)
        if n % 2:
            n += 1
    return _round_up(pl.cdiv(m16, n), 16)


def _pad2(a, rows, cols):
    pr, pc = rows - a.shape[0], cols - a.shape[1]
    if pr or pc:
        a = jnp.pad(a, ((0, pr), (0, pc)))
    return a


def prepare_mlp_params(w_in, b_in, w_out, b_out, *, weight_dtype=jnp.bfloat16):
    """Pad to 128-lane multiples and cast weights to bf16 ONCE (hoisted out of the
    per-call path). Zero padding is exact: padded d_mlp columns give pre == 0 ->
    gelu(0) == 0 -> zero contribution through the padded (zero) W_out rows."""
    d_model, d_mlp = w_in.shape
    dmod_pad = _round_up(d_model, 128)
    dmlp_pad = _round_up(d_mlp, 128)
    pb_in = jnp.pad(b_in, (0, dmlp_pad - d_mlp)) if dmlp_pad != d_mlp else b_in
    pb_out = jnp.pad(b_out, (0, dmod_pad - d_model)) if dmod_pad != d_model else b_out
    return {
        "w_in": _pad2(w_in, dmod_pad, dmlp_pad).astype(weight_dtype),
        "w_out": _pad2(w_out, dmlp_pad, dmod_pad).astype(weight_dtype),
        "b_in": pb_in.reshape(1, dmlp_pad).astype(jnp.float32),
        "b_out": pb_out.reshape(1, dmod_pad).astype(jnp.float32),
        "d_model": d_model,
        "d_mlp": d_mlp,
    }


def _make_mlp_kernel(chunks):
    """chunks: static tuple of (lo, hi) bounds along (padded) d_mlp. Chunking caps the
    live f32 intermediate at (tm, chunk) and accumulates matmul2 into an f32 scratch."""

    def mlp_kernel(x_ref, w_in_ref, b_in_ref, w_out_ref, b_out_ref, o_ref, acc_ref):
        # x_ref:     (tm, dmod_pad)       bf16
        # w_in_ref:  (dmod_pad, dmlp_pad) bf16  (resident, single-buffered)
        # b_in_ref:  (1, dmlp_pad)        f32
        # w_out_ref: (dmlp_pad, dmod_pad) bf16  (resident, single-buffered)
        # b_out_ref: (1, dmod_pad)        f32
        # o_ref:     (tm, dmod_pad)       out dtype
        # acc_ref:   (tm, dmod_pad)       f32 scratch accumulator
        x = x_ref[...]
        for c, (lo, hi) in enumerate(chunks):  # static unroll over d_mlp chunks
            pre = jnp.dot(x, w_in_ref[:, lo:hi],
                          preferred_element_type=jnp.float32) + b_in_ref[:, lo:hi]
            # TODO(synk): on v6e/v7x (bf16 VPU/EUP) compute gelu in bf16 to halve the
            #             VALU/EUP work; f32 kept here as the v5e-safe default.
            post = _gelu_new(pre)
            partial = jnp.dot(post.astype(w_out_ref.dtype), w_out_ref[lo:hi, :],
                              preferred_element_type=jnp.float32)
            if c == 0:
                acc_ref[...] = partial
            else:
                acc_ref[...] += partial
        o_ref[...] = (acc_ref[...] + b_out_ref[...]).astype(o_ref.dtype)

    return mlp_kernel


def _resident_spec(shape, single_buffer):
    """BlockSpec for a grid-invariant (fully resident) operand."""
    idx = lambda i: (0, 0)
    if single_buffer:
        # Double-buffering a grid-invariant weight is pure VMEM waste.
        return pl.BlockSpec(shape, idx, pipeline_mode=pl.Buffered(1))
    return pl.BlockSpec(shape, idx)


def _pallas_mlp(x2d, params, *, tm_eff, out_dtype, single_buffer_weights, max_chunk):
    m_pad, dmod_pad = x2d.shape
    dmlp_pad = params["w_in"].shape[1]
    d_model, d_mlp = params["d_model"], params["d_mlp"]

    chunks = tuple((lo, min(lo + max_chunk, dmlp_pad))
                   for lo in range(0, dmlp_pad, max_chunk))

    bytes_accessed = (
        x2d.size * x2d.dtype.itemsize
        + params["w_in"].size * params["w_in"].dtype.itemsize
        + params["w_out"].size * params["w_out"].dtype.itemsize
        + params["b_in"].size * 4 + params["b_out"].size * 4
        + m_pad * dmod_pad * jnp.dtype(out_dtype).itemsize)
    cost = pl.CostEstimate(
        flops=4 * m_pad * d_model * d_mlp,
        transcendentals=m_pad * d_mlp,
        bytes_accessed=int(bytes_accessed))

    return pl.pallas_call(
        _make_mlp_kernel(chunks),
        out_shape=jax.ShapeDtypeStruct((m_pad, dmod_pad), out_dtype),
        grid_spec=pltpu.PrefetchScalarGridSpec(
            num_scalar_prefetch=0,
            grid=(m_pad // tm_eff,),
            in_specs=[
                pl.BlockSpec((tm_eff, dmod_pad), lambda i: (i, 0)),           # x tile
                _resident_spec((dmod_pad, dmlp_pad), single_buffer_weights),  # W_in
                pl.BlockSpec((1, dmlp_pad), lambda i: (0, 0)),                # b_in
                _resident_spec((dmlp_pad, dmod_pad), single_buffer_weights),  # W_out
                pl.BlockSpec((1, dmod_pad), lambda i: (0, 0)),                # b_out
            ],
            out_specs=pl.BlockSpec((tm_eff, dmod_pad), lambda i: (i, 0)),
            scratch_shapes=[pltpu.VMEM((tm_eff, dmod_pad), jnp.float32)],
        ),
        compiler_params=pltpu.CompilerParams(
            dimension_semantics=("parallel",),
            vmem_limit_bytes=_vmem_limit_bytes(),
        ),
        cost_estimate=cost,
    )(x2d, params["w_in"], params["b_in"], params["w_out"], params["b_out"])


def mlp_forward(x, w_in=None, b_in=None, w_out=None, b_out=None, *, params=None,
                tm=None, out_dtype=None, single_buffer_weights=True, max_chunk=1024):
    """x: [batch, posn, d_model] -> [batch, posn, d_model] (GPT-2 MLP forward).

    Rows (batch*posn) are tiled on a 1-D "parallel" grid; W_in / W_out stay resident
    in VMEM as bf16 (single-buffered); both matmuls accumulate in f32; d_mlp is
    processed in <= max_chunk lane chunks into an f32 VMEM accumulator.

    Precision note: MXU operands are bf16, so results have bf16-input precision even
    when out_dtype is float32; pass out_dtype=jnp.bfloat16 in a bf16 model to also
    halve the output writeback.
    """
    global _weight_buffering_used
    batch, posn, d_model = x.shape
    if params is None:
        params = prepare_mlp_params(w_in, b_in, w_out, b_out)
    assert params["d_model"] == d_model, "params/input d_model mismatch"
    dmod_pad = params["b_out"].shape[1]

    M = batch * posn
    out_dtype = jnp.dtype(out_dtype if out_dtype is not None else x.dtype)

    if tm is not None:
        tm_eff = _round_up(min(max(int(tm), 16), _round_up(M, 16)), 16)
    else:
        tm_eff = _choose_tm(M, _tm_max_for_chip())
    m_pad = _round_up(M, tm_eff)

    x2d = x.reshape(M, d_model)
    if m_pad != M or dmod_pad != d_model:  # skip the pad copy when already aligned
        x2d = jnp.pad(x2d, ((0, m_pad - M), (0, dmod_pad - d_model)))
    x2d = x2d.astype(jnp.bfloat16)

    if single_buffer_weights:
        try:
            out2d = _pallas_mlp(x2d, params, tm_eff=tm_eff, out_dtype=out_dtype,
                                single_buffer_weights=True, max_chunk=max_chunk)
            _weight_buffering_used = "single"
        except Exception:
            # Non-silent fallback: record that Buffered(1) was rejected by this jax /
            # Mosaic build so callers can see the extra-VMEM (double-buffered) config.
            out2d = _pallas_mlp(x2d, params, tm_eff=tm_eff, out_dtype=out_dtype,
                                single_buffer_weights=False, max_chunk=max_chunk)
            _weight_buffering_used = "double"
    else:
        out2d = _pallas_mlp(x2d, params, tm_eff=tm_eff, out_dtype=out_dtype,
                            single_buffer_weights=False, max_chunk=max_chunk)
        _weight_buffering_used = "double"

    return out2d[:M, :d_model].reshape(batch, posn, d_model)


def mlp_reference(x, w_in, b_in, w_out, b_out):
    pre = jnp.einsum("bpd,dm->bpm", x, w_in) + b_in
    post = _gelu_new(pre)
    return jnp.einsum("bpm,md->bpd", post, w_out) + b_out


if __name__ == "__main__":
    # Small config consistent with the module (d_model, d_mlp scaled down).
    d_model = 128
    d_mlp = 512
    init_range = 0.02

    key = jax.random.PRNGKey(0)
    kx1, kx2, kin, kout = jax.random.split(key, 4)

    W_in = init_range * jax.random.normal(kin, (d_model, d_mlp), dtype=jnp.float32)
    W_out = init_range * jax.random.normal(kout, (d_mlp, d_model), dtype=jnp.float32)
    b_in = jnp.zeros((d_mlp,), dtype=jnp.float32)
    b_out = jnp.zeros((d_model,), dtype=jnp.float32)

    # Pad/cast the weights once (hoisted out of the per-call path) and reuse.
    params = prepare_mlp_params(W_in, b_in, W_out, b_out)

    # Case 1: small M = 16 (single grid step).
    x1 = jax.random.normal(kx1, (2, 8, d_model), dtype=jnp.float32)
    out1 = jax.block_until_ready(mlp_forward(x1, params=params))
    ref1 = mlp_reference(x1, W_in, b_in, W_out, b_out)
    assert out1.shape == x1.shape
    err1 = float(jnp.max(jnp.abs(out1 - ref1)))
    assert err1 < 1e-2, f"case1 max abs err = {err1}"

    # Case 2: M = 272 (multi-tile grid, M not a multiple of the tile -> row padding,
    # even step count for the megacore path).
    x2 = jax.random.normal(kx2, (2, 136, d_model), dtype=jnp.float32)
    out2 = jax.block_until_ready(mlp_forward(x2, params=params))
    ref2 = mlp_reference(x2, W_in, b_in, W_out, b_out)
    assert out2.shape == x2.shape
    err2 = float(jnp.max(jnp.abs(out2 - ref2)))
    assert err2 < 1e-2, f"case2 max abs err = {err2}"

    print("KERNEL_OK")
</pallas_src>

<mosaic_0001>
module attributes {stable_mosaic.version = 11 : i64} {
  func.func @mlp_kernel(%arg0: i32, %arg1: memref<16x128xbf16, #tpu.memory_space<vmem>>, %arg2: memref<128x512xbf16, #tpu.memory_space<vmem>>, %arg3: memref<1x512xf32, #tpu.memory_space<vmem>>, %arg4: memref<512x128xbf16, #tpu.memory_space<vmem>>, %arg5: memref<1x128xf32, #tpu.memory_space<vmem>>, %arg6: memref<16x128xf32, #tpu.memory_space<vmem>>, %arg7: memref<16x128xf32, #tpu.memory_space<vmem>>) attributes {dimension_semantics = [#tpu.dimension_semantics<parallel>], iteration_bounds = array<i64: 1>, scalar_prefetch = 0 : i64, scratch_operands = 1 : i64, tpu.core_type = #tpu.core_type<tc>, window_params = [{transform_indices = @transform_0, window_bounds = array<i64: 16, 128>}, {pipeline_mode = #tpu.pipeline_mode<synchronous>, transform_indices = @transform_1, window_bounds = array<i64: 128, 512>}, {pipeline_mode = #tpu.pipeline_mode<synchronous>, transform_indices = @transform_2, window_bounds = array<i64: 1, 512>}, {pipeline_mode = #tpu.pipeline_mode<synchronous>, transform_indices = @transform_3, window_bounds = array<i64: 512, 128>}, {pipeline_mode = #tpu.pipeline_mode<synchronous>, transform_indices = @transform_4, window_bounds = array<i64: 1, 128>}, {transform_indices = @transform_5, window_bounds = array<i64: 16, 128>}]} {
    %c0 = arith.constant 0 : index
    %c0_0 = arith.constant 0 : index
    %0 = vector.load %arg1[%c0, %c0_0] : memref<16x128xbf16, #tpu.memory_space<vmem>>, vector<16x128xbf16>
    %c0_1 = arith.constant 0 : index
    %c0_2 = arith.constant 0 : index
    %1 = vector.load %arg2[%c0_1, %c0_2] : memref<128x512xbf16, #tpu.memory_space<vmem>>, vector<128x512xbf16>
    %cst = arith.constant dense<0.000000e+00> : vector<16x512xf32>
    %2 = tpu.matmul %0, %1, %cst {dimension_numbers = #tpu.dot_dimension_numbers<[1], [0], [0], [1], [0, 0, 1, 1], [], []>} : vector<16x128xbf16>, vector<128x512xbf16>, vector<16x512xf32> -> vector<16x512xf32>
    %c0_3 = arith.constant 0 : index
    %c0_4 = arith.constant 0 : index
    %3 = vector.load %arg3[%c0_3, %c0_4] : memref<1x512xf32, #tpu.memory_space<vmem>>, vector<1x512xf32>
    %4 = vector.broadcast %3 : vector<1x512xf32> to vector<16x512xf32>
    %5 = arith.addf %2, %4 : vector<16x512xf32>
    %6 = arith.mulf %5, %5 : vector<16x512xf32>
    %cst_5 = arith.constant 0.797884583 : f32
    %7 = vector.broadcast %cst_5 : f32 to vector<16x512xf32>
    %8 = arith.mulf %7, %5 : vector<16x512xf32>
    %cst_6 = arith.constant 4.471500e-02 : f32
    %9 = vector.broadcast %cst_6 : f32 to vector<16x512xf32>
    %10 = arith.mulf %9, %6 : vector<16x512xf32>
    %cst_7 = arith.constant 1.000000e+00 : f32
    %11 = vector.broadcast %cst_7 : f32 to vector<16x512xf32>
    %12 = arith.addf %11, %10 : vector<16x512xf32>
    %13 = arith.mulf %8, %12 : vector<16x512xf32>
    %14 = math.tanh %13 : vector<16x512xf32>
    %cst_8 = arith.constant 5.000000e-01 : f32
    %15 = vector.broadcast %cst_8 : f32 to vector<16x512xf32>
    %16 = arith.mulf %15, %5 : vector<16x512xf32>
    %cst_9 = arith.constant 1.000000e+00 : f32
    %17 = vector.broadcast %cst_9 : f32 to vector<16x512xf32>
    %18 = arith.addf %17, %14 : vector<16x512xf32>
    %19 = arith.mulf %16, %18 : vector<16x512xf32>
    %20 = arith.truncf %19 : vector<16x512xf32> to vector<16x512xbf16>
    %c0_10 = arith.constant 0 : index
    %c0_11 = arith.constant 0 : index
    %21 = vector.load %arg4[%c0_10, %c0_11] : memref<512x128xbf16, #tpu.memory_space<vmem>>, vector<512x128xbf16>
    %cst_12 = arith.constant dense<0.000000e+00> : vector<16x128xf32>
    %22 = tpu.matmul %20, %21, %cst_12 {dimension_numbers = #tpu.dot_dimension_numbers<[1], [0], [0], [1], [0, 0, 1, 1], [], []>} : vector<16x512xbf16>, vector<512x128xbf16>, vector<16x128xf32> -> vector<16x128xf32>
    %c0_13 = arith.constant 0 : index
    %c0_14 = arith.constant 0 : index
    %23 = vector.load %arg7[%c0_13, %c0_14] : memref<16x128xf32, #tpu.memory_space<vmem>>, vector<16x128xf32>
    tpu.vector_store %arg7[%c0_13, %c0_14], %22 {strides = array<i32>} : memref<16x128xf32, #tpu.memory_space<vmem>>, vector<16x128xf32>,
    %c0_15 = arith.constant 0 : index
    %c0_16 = arith.constant 0 : index
    %24 = vector.load %arg7[%c0_15, %c0_16] : memref<16x128xf32, #tpu.memory_space<vmem>>, vector<16x128xf32>
    %c0_17 = arith.constant 0 : index
    %c0_18 = arith.constant 0 : index
    %25 = vector.load %arg5[%c0_17, %c0_18] : memref<1x128xf32, #tpu.memory_space<vmem>>, vector<1x128xf32>
    %26 = vector.broadcast %25 : vector<1x128xf32> to vector<16x128xf32>
    %27 = arith.addf %24, %26 : vector<16x128xf32>
    %c0_19 = arith.constant 0 : index
    %c0_20 = arith.constant 0 : index
    %28 = vector.load %arg6[%c0_19, %c0_20] : memref<16x128xf32, #tpu.memory_space<vmem>>, vector<16x128xf32>
    tpu.vector_store %arg6[%c0_19, %c0_20], %27 {strides = array<i32>} : memref<16x128xf32, #tpu.memory_space<vmem>>, vector<16x128xf32>,
    return
  }
  func.func @transform_0(%arg0: i32) -> (i32, i32) {
    %c0_i32 = arith.constant 0 : i32
    %c0_i32_0 = arith.constant 0 : i32
    return %arg0, %c0_i32 : i32, i32
  }
  func.func @transform_1(%arg0: i32) -> (i32, i32) {
    %c0_i32 = arith.constant 0 : i32
    %c0_i32_0 = arith.constant 0 : i32
    %c0_i32_1 = arith.constant 0 : i32
    return %c0_i32, %c0_i32_0 : i32, i32
  }
  func.func @transform_2(%arg0: i32) -> (i32, i32) {
    %c0_i32 = arith.constant 0 : i32
    %c0_i32_0 = arith.constant 0 : i32
    %c0_i32_1 = arith.constant 0 : i32
    return %c0_i32, %c0_i32_0 : i32, i32
  }
  func.func @transform_3(%arg0: i32) -> (i32, i32) {
    %c0_i32 = arith.constant 0 : i32
    %c0_i32_0 = arith.constant 0 : i32
    %c0_i32_1 = arith.constant 0 : i32
    return %c0_i32, %c0_i32_0 : i32, i32
  }
  func.func @transform_4(%arg0: i32) -> (i32, i32) {
    %c0_i32 = arith.constant 0 : i32
    %c0_i32_0 = arith.constant 0 : i32
    %c0_i32_1 = arith.constant 0 : i32
    return %c0_i32, %c0_i32_0 : i32, i32
  }
  func.func @transform_5(%arg0: i32) -> (i32, i32) {
    %c0_i32 = arith.constant 0 : i32
    %c0_i32_0 = arith.constant 0 : i32
    return %arg0, %c0_i32 : i32, i32
  }
}

module attributes {stable_mosaic.version = 11 : i64} {
  func.func @mlp_kernel(%arg0: i32, %arg1: memref<16x128xbf16, #tpu.memory_space<vmem>>, %arg2: memref<128x512xbf16, #tpu.memory_space<vmem>>, %arg3: memref<1x512xf32, #tpu.memory_space<vmem>>, %arg4: memref<512x128xbf16, #tpu.memory_space<vmem>>, %arg5: memref<1x128xf32, #tpu.memory_space<vmem>>, %arg6: memref<16x128xf32, #tpu.memory_space<vmem>>, %arg7: memref<16x128xf32, #tpu.memory_space<vmem>>) attributes {dimension_semantics = [#tpu.dimension_semantics<parallel>], iteration_bounds = array<i64: 1>, scalar_prefetch = 0 : i64, scratch_operands = 1 : i64, tpu.core_type = #tpu.core_type<tc>, window_params = [{transform_indices = @transform_0, window_bounds = array<i64: 16, 128>}, {pipeline_mode = #tpu.pipeline_mode<synchronous>, transform_indices = @transform_1, window_bounds = array<i64: 128, 512>}, {pipeline_mode = #tpu.pipeline_mode<synchronous>, transform_indices = @transform_2, window_bounds = array<i64: 1, 512>}, {pipeline_mode = #tpu.pipeline_mode<synchronous>, transform_indices = @transform_3, window_bounds = array<i64: 512, 128>}, {pipeline_mode = #tpu.pipeline_mode<synchronous>, transform_indices = @transform_4, window_bounds = array<i64: 1, 128>}, {transform_indices = @transform_5, window_bounds = array<i64: 16, 128>}]} {
    %c0 = arith.constant 0 : index
    %c0_0 = arith.constant 0 : index
    %0 = vector.load %arg1[%c0, %c0_0] : memref<16x128xbf16, #tpu.memory_space<vmem>>, vector<16x128xbf16>
    %c0_1 = arith.constant 0 : index
    %c0_2 = arith.constant 0 : index
    %1 = vector.load %arg2[%c0_1, %c0_2] : memref<128x512xbf16, #tpu.memory_space<vmem>>, vector<128x512xbf16>
    %cst = arith.constant dense<0.000000e+00> : vector<16x512xf32>
    %2 = tpu.matmul %0, %1, %cst {dimension_numbers = #tpu.dot_dimension_numbers<[1], [0], [0], [1], [0, 0, 1, 1], [], []>} : vector<16x128xbf16>, vector<128x512xbf16>, vector<16x512xf32> -> vector<16x512xf32>
    %c0_3 = arith.constant 0 : index
    %c0_4 = arith.constant 0 : index
    %3 = vector.load %arg3[%c0_3, %c0_4] : memref<1x512xf32, #tpu.memory_space<vmem>>, vector<1x512xf32>
    %4 = vector.broadcast %3 : vector<1x512xf32> to vector<16x512xf32>
    %5 = arith.addf %2, %4 : vector<16x512xf32>
    %6 = arith.mulf %5, %5 : vector<16x512xf32>
    %cst_5 = arith.constant 0.797884583 : f32
    %7 = vector.broadcast %cst_5 : f32 to vector<16x512xf32>
    %8 = arith.mulf %7, %5 : vector<16x512xf32>
    %cst_6 = arith.constant 4.471500e-02 : f32
    %9 = vector.broadcast %cst_6 : f32 to vector<16x512xf32>
    %10 = arith.mulf %9, %6 : vector<16x512xf32>
    %cst_7 = arith.constant 1.000000e+00 : f32
    %11 = vector.broadcast %cst_7 : f32 to vector<16x512xf32>
    %12 = arith.addf %11, %10 : vector<16x512xf32>
    %13 = arith.mulf %8, %12 : vector<16x512xf32>
    %14 = math.tanh %13 : vector<16x512xf32>
    %cst_8 = arith.constant 5.000000e-01 : f32
    %15 = vector.broadcast %cst_8 : f32 to vector<16x512xf32>
    %16 = arith.mulf %15, %5 : vector<16x512xf32>
    %cst_9 = arith.constant 1.000000e+00 : f32
    %17 = vector.broadcast %cst_9 : f32 to vector<16x512xf32>
    %18 = arith.addf %17, %14 : vector<16x512xf32>
    %19 = arith.mulf %16, %18 : vector<16x512xf32>
    %20 = arith.truncf %19 : vector<16x512xf32> to vector<16x512xbf16>
    %c0_10 = arith.constant 0 : index
    %c0_11 = arith.constant 0 : index
    %21 = vector.load %arg4[%c0_10, %c0_11] : memref<512x128xbf16, #tpu.memory_space<vmem>>, vector<512x128xbf16>
    %cst_12 = arith.constant dense<0.000000e+00> : vector<16x128xf32>
    %22 = tpu.matmul %20, %21, %cst_12 {dimension_numbers = #tpu.dot_dimension_numbers<[1], [0], [0], [1], [0, 0, 1, 1], [], []>} : vector<16x512xbf16>, vector<512x128xbf16>, vector<16x128xf32> -> vector<16x128xf32>
    %c0_13 = arith.constant 0 : index
    %c0_14 = arith.constant 0 : index
    %23 = vector.load %arg7[%c0_13, %c0_14] : memref<16x128xf32, #tpu.memory_space<vmem>>, vector<16x128xf32>
    tpu.vector_store %arg7[%c0_13, %c0_14], %22 {strides = array<i32>} : memref<16x128xf32, #tpu.memory_space<vmem>>, vector<16x128xf32>,
    %c0_15 = arith.constant 0 : index
    %c0_16 = arith.constant 0 : index
    %24 = vector.load %arg7[%c0_15, %c0_16] : memref<16x128xf32, #tpu.memory_space<vmem>>, vector<16x128xf32>
    %c0_17 = arith.constant 0 : index
    %c0_18 = arith.constant 0 : index
    %25 = vector.load %arg5[%c0_17, %c0_18] : memref<1x128xf32, #tpu.memory_space<vmem>>, vector<1x128xf32>
    %26 = vector.broadcast %25 : vector<1x128xf32> to vector<16x128xf32>
    %27 = arith.addf %24, %26 : vector<16x128xf32>
    %c0_19 = arith.constant 0 : index
    %c0_20 = arith.constant 0 : index
    %28 = vector.load %arg6[%c0_19, %c0_20] : memref<16x128xf32, #tpu.memory_space<vmem>>, vector<16x128xf32>
    tpu.vector_store %arg6[%c0_19, %c0_20], %27 {strides = array<i32>} : memref<16x128xf32, #tpu.memory_space<vmem>>, vector<16x128xf32>,
    return
  }
  func.func @transform_0(%arg0: i32) -> (i32, i32) {
    %c0_i32 = arith.constant 0 : i32
    %c0_i32_0 = arith.constant 0 : i32
    return %arg0, %c0_i32 : i32, i32
  }
  func.func @transform_1(%arg0: i32) -> (i32, i32) {
    %c0_i32 = arith.constant 0 : i32
    %c0_i32_0 = arith.constant 0 : i32
    %c0_i32_1 = arith.constant 0 : i32
    return %c0_i32, %c0_i32_0 : i32, i32
  }
  func.func @transform_2(%arg0: i32) -> (i32, i32) {
    %c0_i32 = arith.constant 0 : i32
    %c0_i32_0 = arith.constant 0 : i32
    %c0_i32_1 = arith.constant 0 : i32
    return %c0_i32, %c0_i32_0 : i32, i32
  }
  func.func @transform_3(%arg0: i32) -> (i32, i32) {
    %c0_i32 = arith.constant 0 : i32
    %c0_i32_0 = arith.constant 0 : i32
    %c0_i32_1 = arith.constant 0 : i32
    return %c0_i32, %c0_i32_0 : i32, i32
  }
  func.func @transform_4(%arg0: i32) -> (i32, i32) {
    %c0_i32 = arith.constant 0 : i32
    %c0_i32_0 = arith.constant 0 : i32
    %c0_i32_1 = arith.constant 0 : i32
    return %c0_i32, %c0_i32_0 : i32, i32
  }
  func.func @transform_5(%arg0: i32) -> (i32, i32) {
    %c0_i32 = arith.constant 0 : i32
    %c0_i32_0 = arith.constant 0 : i32
    return %arg0, %c0_i32 : i32, i32
  }
}

</mosaic_0001>

<llo_original>
// kernel: tpu_custom_call.1
$region0: #{tpu_custom_call.1}
  #allocation0 [shape = 'u32[]', space=smem, size = 0x4, offset = 0x4, fixed_abs, tag = 'smem constant byte address 0x4 - core index']
  #allocation1 [shape = 'u32[144,128]{1,0:T(1,128)}', space=vmem, size = 0x12000, scoped, tag = 'internal scratch']
  #allocation2 [shape = 'f32[16,128]{1,0:T(8,128)}', space=vmem, size = 0x2000, scoped, tag = 'scratch operand']
  %s0 = inlined_call_operand.hbm [shape: bf16[16,128], index: 0, kind: input, shape index: {}]
  %s1 = inlined_call_operand.hbm [shape: bf16[128,512], index: 1, kind: input, shape index: {}]
  %s2 = inlined_call_operand.vmem [shape: f32[1,512], index: 2, kind: input, shape index: {}]
  %s3 = inlined_call_operand.hbm [shape: bf16[512,128], index: 3, kind: input, shape index: {}]
  %s4 = inlined_call_operand.vmem [shape: f32[1,128], index: 4, kind: input, shape index: {}]
  %s5 = inlined_call_operand.hbm [shape: f32[16,128], index: 5, kind: output, shape index: {}]
  %s6 = sld [smem:[#allocation0]]
  $region42: #{tpu_custom_call.1} parent=0
    _
  %s8 = ssub.s32 1, %s6
  %s9 = scalar_select 0, %s8, %s6
  $region1: #{tpu_custom_call.1} parent=0
    #allocation3 [shape = 'u8[4096]{0}', space=vmem, size = 0x1000, scoped, tag = 'input window, operand 0, single buffered']
    #allocation4 [shape = 's32[1]{0}', space=sflag, size = 0x4, scoped, tag = 'scoped memory for tpu_custom_call.1']
    #allocation5 [shape = 's32[1]{0}', space=sflag, size = 0x4, scoped, tag = 'scoped memory for tpu_custom_call.1']
    #allocation6 [shape = 'u8[131072]{0}', space=vmem, size = 0x20000, scoped, tag = 'input window, operand 1, single buffered']
    #allocation7 [shape = 's32[1]{0}', space=sflag, size = 0x4, scoped, tag = 'scoped memory for tpu_custom_call.1']
    #allocation8 [shape = 'u8[131072]{0}', space=vmem, size = 0x20000, scoped, tag = 'input window, operand 3, single buffered']
    #allocation9 [shape = 'u8[8192]{0}', space=vmem, size = 0x2000, scoped, tag = 'output window, operand 0, single buffered']
    %10 = vsyncpa [#allocation4], 0
    %11 = vsyncpa [#allocation7], 0
    %12 = vsyncpa [#allocation5], 0
    // Predicated region
    $region2: #{tpu_custom_call.1} parent=1 // pred_check
      _
    $region3: #{tpu_custom_call.1} parent=1 // pred_check_branch
      %14 = sbr.rel (0) target = $region5
    $region4: #{tpu_custom_call.1} parent=1 // pred_region
      %s16 = ssub.s32 128, 128
      %17 = vsyncadd [#allocation4], %s16
      %s18 = sshll.u32 [#allocation3], 4
      %s19 = int_to_ptr.vmem [resolvable:$true] %s18
      %24 = dma.hbm_to_vmem [thread:$0]  %s0, 128, %s19, [#allocation4], 64, 64, 4
    $region5: #{tpu_custom_call.1} parent=1 // pred_fallthru
      _
    // Predicated region
    $region6: #{tpu_custom_call.1} parent=1 // pred_check
      _
    $region7: #{tpu_custom_call.1} parent=1 // pred_check_branch
      %26 = sbr.rel (0) target = $region9
    $region8: #{tpu_custom_call.1} parent=1 // pred_region
      %s28 = ssub.s32 4096, 4096
      %29 = vsyncadd [#allocation7], %s28
      %s30 = sshll.u32 [#allocation6], 4
      %s31 = int_to_ptr.vmem [resolvable:$true] %s30
      %36 = dma.hbm_to_vmem [thread:$0]  %s1, 4096, %s31, [#allocation7], 256, 256, 16
    $region9: #{tpu_custom_call.1} parent=1 // pred_fallthru
      _
    // Predicated region
    $region10: #{tpu_custom_call.1} parent=1 // pred_check
      _
    $region11: #{tpu_custom_call.1} parent=1 // pred_check_branch
      %38 = sbr.rel (0) target = $region13
    $region12: #{tpu_custom_call.1} parent=1 // pred_region
      _
    $region13: #{tpu_custom_call.1} parent=1 // pred_fallthru
      _
    // Predicated region
    $region14: #{tpu_custom_call.1} parent=1 // pred_check
      _
    $region15: #{tpu_custom_call.1} parent=1 // pred_check_branch
      %40 = sbr.rel (0) target = $region17
    $region16: #{tpu_custom_call.1} parent=1 // pred_region
      %s42 = ssub.s32 4096, 4096
      %43 = vsyncadd [#allocation7], %s42
      %s44 = sshll.u32 [#allocation8], 4
      %s45 = int_to_ptr.vmem [resolvable:$true] %s44
      %50 = dma.hbm_to_vmem [thread:$0]  %s3, 4096, %s45, [#allocation7], 64, 64, 4
    $region17: #{tpu_custom_call.1} parent=1 // pred_fallthru
      _
    // Predicated region
    $region18: #{tpu_custom_call.1} parent=1 // pred_check
      _
    $region19: #{tpu_custom_call.1} parent=1 // pred_check_branch
      %52 = sbr.rel (0) target = $region21
    $region20: #{tpu_custom_call.1} parent=1 // pred_region
      _
    $region21: #{tpu_custom_call.1} parent=1 // pred_fallthru
      _
    // Predicated region
    $region22: #{tpu_custom_call.1} parent=1 // pred_check
      _
    $region23: #{tpu_custom_call.1} parent=1 // pred_check_branch
      %54 = sbr.rel (0) target = $region25
    $region24: #{tpu_custom_call.1} parent=1 // pred_region
      %55 = dma.done [#allocation4], 128
    $region25: #{tpu_custom_call.1} parent=1 // pred_fallthru
      _
    // Predicated region
    $region26: #{tpu_custom_call.1} parent=1 // pred_check
      _
    $region27: #{tpu_custom_call.1} parent=1 // pred_check_branch
      %57 = sbr.rel (0) target = $region29
    $region28: #{tpu_custom_call.1} parent=1 // pred_region
      %58 = dma.done [#allocation7], 4096
    $region29: #{tpu_custom_call.1} parent=1 // pred_fallthru
      _
    // Predicated region
    $region30: #{tpu_custom_call.1} parent=1 // pred_check
      _
    $region31: #{tpu_custom_call.1} parent=1 // pred_check_branch
      %60 = sbr.rel (0) target = $region33
    $region32: #{tpu_custom_call.1} parent=1 // pred_region
      %61 = dma.done [#allocation7], 4096
    $region33: #{tpu_custom_call.1} parent=1 // pred_fallthru
      _
    %v63 = vld [vmem:[#allocation3] sm:$0xf]
    %v64 = vld [vmem:[#allocation3 + $0x4] sm:$0xf]
    %v65 = vld [vmem:[#allocation6] sm:$0xff]
    %v66 = vld [vmem:[#allocation6 + $0x8] sm:$0xff]
    %v67 = vld [vmem:[#allocation6 + $0x10] sm:$0xff]
    %v68 = vld [vmem:[#allocation6 + $0x18] sm:$0xff]
    %v69 = vld [vmem:[#allocation6 + $0x20] sm:$0xff]
    %v70 = vld [vmem:[#allocation6 + $0x28] sm:$0xff]
    %v71 = vld [vmem:[#allocation6 + $0x30] sm:$0xff]
    %v72 = vld [vmem:[#allocation6 + $0x38] sm:$0xff]
    %v73 = vld [vmem:[#allocation6 + $0x40] sm:$0xff]
    %v74 = vld [vmem:[#allocation6 + $0x48] sm:$0xff]
    %v75 = vld [vmem:[#allocation6 + $0x50] sm:$0xff]
    %v76 = vld [vmem:[#allocation6 + $0x58] sm:$0xff]
    %v77 = vld [vmem:[#allocation6 + $0x60] sm:$0xff]
    %v78 = vld [vmem:[#allocation6 + $0x68] sm:$0xff]
    %v79 = vld [vmem:[#allocation6 + $0x70] sm:$0xff]
    %v80 = vld [vmem:[#allocation6 + $0x78] sm:$0xff]
    %v81 = vld [vmem:[#allocation6 + $0x80] sm:$0xff]
    %v82 = vld [vmem:[#allocation6 + $0x88] sm:$0xff]
    %v83 = vld [vmem:[#allocation6 + $0x90] sm:$0xff]
    %v84 = vld [vmem:[#allocation6 + $0x98] sm:$0xff]
    %v85 = vld [vmem:[#allocation6 + $0xa0] sm:$0xff]
    %v86 = vld [vmem:[#allocation6 + $0xa8] sm:$0xff]
    %v87 = vld [vmem:[#allocation6 + $0xb0] sm:$0xff]
    %v88 = vld [vmem:[#allocation6 + $0xb8] sm:$0xff]
    %v89 = vld [vmem:[#allocation6 + $0xc0] sm:$0xff]
    %v90 = vld [vmem:[#allocation6 + $0xc8] sm:$0xff]
    %v91 = vld [vmem:[#allocation6 + $0xd0] sm:$0xff]
    %v92 = vld [vmem:[#allocation6 + $0xd8] sm:$0xff]
    %v93 = vld [vmem:[#allocation6 + $0xe0] sm:$0xff]
    %v94 = vld [vmem:[#allocation6 + $0xe8] sm:$0xff]
    %v95 = vld [vmem:[#allocation6 + $0xf0] sm:$0xff]
    %v96 = vld [vmem:[#allocation6 + $0xf8] sm:$0xff]
    %v97 = vld [vmem:[%s2] sm:$0xf]
    %v99 = vlaneseq
    %v100 = vshrl.u32 %v99, 7
    %v101 = vsub.s32 0, %v100
    %v102 = vrot.slane %v97, %v101
    %v103 = vlaneseq
    %v104 = vshrl.u32 %v103, 7
    %v105 = vsub.s32 1, %v104
    %v106 = vrot.slane %v97, %v105
    %v107 = vlaneseq
    %v108 = vshrl.u32 %v107, 7
    %v109 = vsub.s32 2, %v108
    %v110 = vrot.slane %v97, %v109
    %v111 = vlaneseq
    %v112 = vshrl.u32 %v111, 7
    %v113 = vsub.s32 3, %v112
    %v114 = vrot.slane %v97, %v113
    %v121 = vunpack.c.l.b16 %v63
    %v122 = vunpack.c.l.b16 %v64
    %v123 = vpack.c.b16 %v122, %v121
    %v157 = vunpack.c.l.b16 %v65
    %v158 = vunpack.c.h.b16 %v65
    %v159 = vunpack.c.l.b16 %v66
    %v160 = vunpack.c.h.b16 %v66
    %v161 = vunpack.c.l.b16 %v67
    %v162 = vunpack.c.h.b16 %v67
    %v163 = vunpack.c.l.b16 %v68
    %v164 = vunpack.c.h.b16 %v68
    %v165 = vunpack.c.l.b16 %v69
    %v166 = vunpack.c.h.b16 %v69
    %v167 = vunpack.c.l.b16 %v70
    %v168 = vunpack.c.h.b16 %v70
    %v169 = vunpack.c.l.b16 %v71
    %v170 = vunpack.c.h.b16 %v71
    %v171 = vunpack.c.l.b16 %v72
    %v172 = vunpack.c.h.b16 %v72
    %v173 = vunpack.c.l.b16 %v73
    %v174 = vunpack.c.h.b16 %v73
    %v175 = vunpack.c.l.b16 %v74
    %v176 = vunpack.c.h.b16 %v74
    %v177 = vunpack.c.l.b16 %v75
    %v178 = vunpack.c.h.b16 %v75
    %v179 = vunpack.c.l.b16 %v76
    %v180 = vunpack.c.h.b16 %v76
    %v181 = vunpack.c.l.b16 %v77
    %v182 = vunpack.c.h.b16 %v77
    %v183 = vunpack.c.l.b16 %v78
    %v184 = vunpack.c.h.b16 %v78
    %v185 = vunpack.c.l.b16 %v79
    %v186 = vunpack.c.h.b16 %v79
    %v187 = vunpack.c.l.b16 %v80
    %v188 = vunpack.c.h.b16 %v80
    %v189 = vunpack.c.l.b16 %v81
    %v190 = vunpack.c.h.b16 %v81
    %v191 = vunpack.c.l.b16 %v82
    %v192 = vunpack.c.h.b16 %v82
    %v193 = vunpack.c.l.b16 %v83
    %v194 = vunpack.c.h.b16 %v83
    %v195 = vunpack.c.l.b16 %v84
    %v196 = vunpack.c.h.b16 %v84
    %v197 = vunpack.c.l.b16 %v85
    %v198 = vunpack.c.h.b16 %v85
    %v199 = vunpack.c.l.b16 %v86
    %v200 = vunpack.c.h.b16 %v86
    %v201 = vunpack.c.l.b16 %v87
    %v202 = vunpack.c.h.b16 %v87
    %v203 = vunpack.c.l.b16 %v88
    %v204 = vunpack.c.h.b16 %v88
    %v205 = vunpack.c.l.b16 %v89
    %v206 = vunpack.c.h.b16 %v89
    %v207 = vunpack.c.l.b16 %v90
    %v208 = vunpack.c.h.b16 %v90
    %v209 = vunpack.c.l.b16 %v91
    %v210 = vunpack.c.h.b16 %v91
    %v211 = vunpack.c.l.b16 %v92
    %v212 = vunpack.c.h.b16 %v92
    %v213 = vunpack.c.l.b16 %v93
    %v214 = vunpack.c.h.b16 %v93
    %v215 = vunpack.c.l.b16 %v94
    %v216 = vunpack.c.h.b16 %v94
    %v217 = vunpack.c.l.b16 %v95
    %v218 = vunpack.c.h.b16 %v95
    %v219 = vunpack.c.l.b16 %v96
    %v220 = vunpack.c.h.b16 %v96
    %v221 = vpack.c.b16 %v161, %v157
    %v222 = vpack.c.b16 %v162, %v158
    %v223 = vpack.c.b16 %v163, %v159
    %v224 = vpack.c.b16 %v164, %v160
    %v225 = vpack.c.b16 %v169, %v165
    %v226 = vpack.c.b16 %v170, %v166
    %v227 = vpack.c.b16 %v171, %v167
    %v228 = vpack.c.b16 %v172, %v168
    %v229 = vpack.c.b16 %v177, %v173
    %v230 = vpack.c.b16 %v178, %v174
    %v231 = vpack.c.b16 %v179, %v175
    %v232 = vpack.c.b16 %v180, %v176
    %v233 = vpack.c.b16 %v185, %v181
    %v234 = vpack.c.b16 %v186, %v182
    %v235 = vpack.c.b16 %v187, %v183
    %v236 = vpack.c.b16 %v188, %v184
    %v237 = vpack.c.b16 %v193, %v189
    %v238 = vpack.c.b16 %v194, %v190
    %v239 = vpack.c.b16 %v195, %v191
    %v240 = vpack.c.b16 %v196, %v192
    %v241 = vpack.c.b16 %v201, %v197
    %v242 = vpack.c.b16 %v202, %v198
    %v243 = vpack.c.b16 %v203, %v199
    %v244 = vpack.c.b16 %v204, %v200
    %v245 = vpack.c.b16 %v209, %v205
    %v246 = vpack.c.b16 %v210, %v206
    %v247 = vpack.c.b16 %v211, %v207
    %v248 = vpack.c.b16 %v212, %v208
    %v249 = vpack.c.b16 %v217, %v213
    %v250 = vpack.c.b16 %v218, %v214
    %v251 = vpack.c.b16 %v219, %v215
    %v252 = vpack.c.b16 %v220, %v216
    %285 = vmatprep.subr.bf16.mxu0 %v222
    %286 = vmatpush1.bf16.msra.mxu0 %v221
    %287 = vmatprep.subr.bf16.mxu0 %v226
    %288 = vmatpush1.bf16.msra.mxu0 %v225
    %289 = vmatprep.subr.bf16.mxu0 %v230
    %290 = vmatpush1.bf16.msra.mxu0 %v229
    %291 = vmatprep.subr.bf16.mxu0 %v234
    %292 = vmatpush1.bf16.msra.mxu0 %v233
    %293 = vmatprep.subr.bf16.mxu0 %v238
    %294 = vmatpush1.bf16.msra.mxu0 %v237
    %295 = vmatprep.subr.bf16.mxu0 %v242
    %296 = vmatpush1.bf16.msra.mxu0 %v241
    %297 = vmatprep.subr.bf16.mxu0 %v246
    %298 = vmatpush1.bf16.msra.mxu0 %v245
    %299 = vmatprep.subr.bf16.mxu0 %v250
    %300 = vmatpush1.bf16.msra.mxu0 %v249
    %301 = vmatprep.subr.bf16.mxu0 0
    %302 = vmatpush1.bf16.msra.mxu0 0
    %303 = vmatprep.subr.bf16.mxu0 0
    %304 = vmatpush1.bf16.msra.mxu0 0
    %305 = vmatprep.subr.bf16.mxu0 0
    %306 = vmatpush1.bf16.msra.mxu0 0
    %307 = vmatprep.subr.bf16.mxu0 0
    %308 = vmatpush1.bf16.msra.mxu0 0
    %309 = vmatprep.subr.bf16.mxu0 0
    %310 = vmatpush1.bf16.msra.mxu0 0
    %311 = vmatprep.subr.bf16.mxu0 0
    %312 = vmatpush1.bf16.msra.mxu0 0
    %313 = vmatprep.subr.bf16.mxu0 0
    %314 = vmatpush1.bf16.msra.mxu0 0
    %315 = vmatprep.subr.bf16.mxu0 0
    %316 = vmatpush1.bf16.msra.mxu0 0
    %317 = vmatprep.mubr.bf16.mxu0 0
    %318 = vmatmul.mubr.bf16.gmra.mrb[0].mxu0 %v123
    %v319 = vpop.f32.mrb[0].mxu0
    %v320 = vadd.f32 %v102, %v319
    %v321 = vpop.f32.mrb[0].mxu0
    %v322 = vadd.f32 %v106, %v321
    %v323 = vpop.f32.mrb[0].mxu0
    %v324 = vadd.f32 %v102, %v323
    %v325 = vpop.f32.mrb[0].mxu0
    %v326 = vadd.f32 %v106, %v325
    %327 = vdwg.mxu0
    %328 = vmatprep.subr.bf16.mxu0 %v224
    %329 = vmatpush1.bf16.msra.mxu0 %v223
    %330 = vmatprep.subr.bf16.mxu0 %v228
    %331 = vmatpush1.bf16.msra.mxu0 %v227
    %332 = vmatprep.subr.bf16.mxu0 %v232
    %333 = vmatpush1.bf16.msra.mxu0 %v231
    %334 = vmatprep.subr.bf16.mxu0 %v236
    %335 = vmatpush1.bf16.msra.mxu0 %v235
    %336 = vmatprep.subr.bf16.mxu0 %v240
    %337 = vmatpush1.bf16.msra.mxu0 %v239
    %338 = vmatprep.subr.bf16.mxu0 %v244
    %339 = vmatpush1.bf16.msra.mxu0 %v243
    %340 = vmatprep.subr.bf16.mxu0 %v248
    %341 = vmatpush1.bf16.msra.mxu0 %v247
    %342 = vmatprep.subr.bf16.mxu0 %v252
    %343 = vmatpush1.bf16.msra.mxu0 %v251
    %344 = vmatprep.subr.bf16.mxu0 0
    %345 = vmatpush1.bf16.msra.mxu0 0
    %346 = vmatprep.subr.bf16.mxu0 0
    %347 = vmatpush1.bf16.msra.mxu0 0
    %348 = vmatprep.subr.bf16.mxu0 0
    %349 = vmatpush1.bf16.msra.mxu0 0
    %350 = vmatprep.subr.bf16.mxu0 0
    %351 = vmatpush1.bf16.msra.mxu0 0
    %352 = vmatprep.subr.bf16.mxu0 0
    %353 = vmatpush1.bf16.msra.mxu0 0
    %354 = vmatprep.subr.bf16.mxu0 0
    %355 = vmatpush1.bf16.msra.mxu0 0
    %356 = vmatprep.subr.bf16.mxu0 0
    %357 = vmatpush1.bf16.msra.mxu0 0
    %358 = vmatprep.subr.bf16.mxu0 0
    %359 = vmatpush1.bf16.msra.mxu0 0
    %360 = vmatprep.mubr.bf16.mxu0 0
    %361 = vmatmul.mubr.bf16.gmra.mrb[0].mxu0 %v123
    %v362 = vpop.f32.mrb[0].mxu0
    %v363 = vadd.f32 %v110, %v362
    %v364 = vpop.f32.mrb[0].mxu0
    %v365 = vadd.f32 %v114, %v364
    %v366 = vpop.f32.mrb[0].mxu0
    %v367 = vadd.f32 %v110, %v366
    %v368 = vpop.f32.mrb[0].mxu0
    %v369 = vadd.f32 %v114, %v368
    %370 = vdwg.mxu0
    %v371 = vmul.f32 %v320, %v320
    %v372 = vmul.f32 %v322, %v322
    %v373 = vmul.f32 %v363, %v363
    %v374 = vmul.f32 %v365, %v365
    %v375 = vmul.f32 %v324, %v324
    %v376 = vmul.f32 %v326, %v326
    %v377 = vmul.f32 %v367, %v367
    %v378 = vmul.f32 %v369, %v369
    %v379 = vmul.f32 %v320, 0.7978846
    %v380 = vmul.f32 %v322, 0.7978846
    %v381 = vmul.f32 %v363, 0.7978846
    %v382 = vmul.f32 %v365, 0.7978846
    %v383 = vmul.f32 %v324, 0.7978846
    %v384 = vmul.f32 %v326, 0.7978846
    %v385 = vmul.f32 %v367, 0.7978846
    %v386 = vmul.f32 %v369, 0.7978846
    %v387 = vmul.f32 %v371, 0.044715
    %v388 = vmul.f32 %v372, 0.044715
    %v389 = vmul.f32 %v373, 0.044715
    %v390 = vmul.f32 %v374, 0.044715
    %v391 = vmul.f32 %v375, 0.044715
    %v392 = vmul.f32 %v376, 0.044715
    %v393 = vmul.f32 %v377, 0.044715
    %v394 = vmul.f32 %v378, 0.044715
    %v395 = vadd.f32 %v387, 1.0
    %v396 = vadd.f32 %v388, 1.0
    %v397 = vadd.f32 %v389, 1.0
    %v398 = vadd.f32 %v390, 1.0
    %v399 = vadd.f32 %v391, 1.0
    %v400 = vadd.f32 %v392, 1.0
    %v401 = vadd.f32 %v393, 1.0
    %v402 = vadd.f32 %v394, 1.0
    %v403 = vmul.f32 %v379, %v395
    %v404 = vmul.f32 %v380, %v396
    %v405 = vmul.f32 %v381, %v397
    %v406 = vmul.f32 %v382, %v398
    %v407 = vmul.f32 %v383, %v399
    %v408 = vmul.f32 %v384, %v400
    %v409 = vmul.f32 %v385, %v401
    %v410 = vmul.f32 %v386, %v402
    %v411 = vtanh.pop %v403
    %v412 = vtanh.pop %v404
    %v413 = vtanh.pop %v405
    %v414 = vtanh.pop %v406
    %v415 = vtanh.pop %v407
    %v416 = vtanh.pop %v408
    %v417 = vtanh.pop %v409
    %v418 = vtanh.pop %v410
    %v419 = vmul.f32 %v320, 0.5
    %v420 = vmul.f32 %v322, 0.5
    %v421 = vmul.f32 %v363, 0.5
    %v422 = vmul.f32 %v365, 0.5
    %v423 = vmul.f32 %v324, 0.5
    %v424 = vmul.f32 %v326, 0.5
    %v425 = vmul.f32 %v367, 0.5
    %v426 = vmul.f32 %v369, 0.5
    %v427 = vadd.f32 %v411, 1.0
    %v428 = vadd.f32 %v412, 1.0
    %v429 = vadd.f32 %v413, 1.0
    %v430 = vadd.f32 %v414, 1.0
    %v431 = vadd.f32 %v415, 1.0
    %v432 = vadd.f32 %v416, 1.0
    %v433 = vadd.f32 %v417, 1.0
    %v434 = vadd.f32 %v418, 1.0
    %v435 = vmul.f32 %v419, %v427
    %v436 = vmul.f32 %v420, %v428
    %v437 = vmul.f32 %v421, %v429
    %v438 = vmul.f32 %v422, %v430
    %v439 = vmul.f32 %v423, %v431
    %v440 = vmul.f32 %v424, %v432
    %v441 = vmul.f32 %v425, %v433
    %v442 = vmul.f32 %v426, %v434
    %v443 = vpack.c.bf16 %v439, %v435
    %v444 = vpack.c.bf16 %v440, %v436
    %v445 = vpack.c.bf16 %v441, %v437
    %v446 = vpack.c.bf16 %v442, %v438
    %v447 = vld [vmem:[#allocation8] sm:$0xf]
    %v448 = vld [vmem:[#allocation8 + $0x4] sm:$0xf]
    %v449 = vld [vmem:[#allocation8 + $0x8] sm:$0xf]
    %v450 = vld [vmem:[#allocation8 + $0xc] sm:$0xf]
    %v451 = vld [vmem:[#allocation8 + $0x10] sm:$0xf]
    %v452 = vld [vmem:[#allocation8 + $0x14] sm:$0xf]
    %v453 = vld [vmem:[#allocation8 + $0x18] sm:$0xf]
    %v454 = vld [vmem:[#allocation8 + $0x1c] sm:$0xf]
    %v455 = vld [vmem:[#allocation8 + $0x20] sm:$0xf]
    %v456 = vld [vmem:[#allocation8 + $0x24] sm:$0xf]
    %v457 = vld [vmem:[#allocation8 + $0x28] sm:$0xf]
    %v458 = vld [vmem:[#allocation8 + $0x2c] sm:$0xf]
    %v459 = vld [vmem:[#allocation8 + $0x30] sm:$0xf]
    %v460 = vld [vmem:[#allocation8 + $0x34] sm:$0xf]
    %v461 = vld [vmem:[#allocation8 + $0x38] sm:$0xf]
    %v462 = vld [vmem:[#allocation8 + $0x3c] sm:$0xf]
    %v463 = vld [vmem:[#allocation8 + $0x40] sm:$0xf]
    %v464 = vld [vmem:[#allocation8 + $0x44] sm:$0xf]
    %v465 = vld [vmem:[#allocation8 + $0x48] sm:$0xf]
    %v466 = vld [vmem:[#allocation8 + $0x4c] sm:$0xf]
    %v467 = vld [vmem:[#allocation8 + $0x50] sm:$0xf]
    %v468 = vld [vmem:[#allocation8 + $0x54] sm:$0xf]
    %v469 = vld [vmem:[#allocation8 + $0x58] sm:$0xf]
    %v470 = vld [vmem:[#allocation8 + $0x5c] sm:$0xf]
    %v471 = vld [vmem:[#allocation8 + $0x60] sm:$0xf]
    %v472 = vld [vmem:[#allocation8 + $0x64] sm:$0xf]
    %v473 = vld [vmem:[#allocation8 + $0x68] sm:$0xf]
    %v474 = vld [vmem:[#allocation8 + $0x6c] sm:$0xf]
    %v475 = vld [vmem:[#allocation8 + $0x70] sm:$0xf]
    %v476 = vld [vmem:[#allocation8 + $0x74] sm:$0xf]
    %v477 = vld [vmem:[#allocation8 + $0x78] sm:$0xf]
    %v478 = vld [vmem:[#allocation8 + $0x7c] sm:$0xf]
    %v479 = vld [vmem:[#allocation8 + $0x80] sm:$0xf]
    %v480 = vld [vmem:[#allocation8 + $0x84] sm:$0xf]
    %v481 = vld [vmem:[#allocation8 + $0x88] sm:$0xf]
    %v482 = vld [vmem:[#allocation8 + $0x8c] sm:$0xf]
    %v483 = vld [vmem:[#allocation8 + $0x90] sm:$0xf]
    %v484 = vld [vmem:[#allocation8 + $0x94] sm:$0xf]
    %v485 = vld [vmem:[#allocation8 + $0x98] sm:$0xf]
    %v486 = vld [vmem:[#allocation8 + $0x9c] sm:$0xf]
    %v487 = vld [vmem:[#allocation8 + $0xa0] sm:$0xf]
    %v488 = vld [vmem:[#allocation8 + $0xa4] sm:$0xf]
    %v489 = vld [vmem:[#allocation8 + $0xa8] sm:$0xf]
    %v490 = vld [vmem:[#allocation8 + $0xac] sm:$0xf]
    %v491 = vld [vmem:[#allocation8 + $0xb0] sm:$0xf]
    %v492 = vld [vmem:[#allocation8 + $0xb4] sm:$0xf]
    %v493 = vld [vmem:[#allocation8 + $0xb8] sm:$0xf]
    %v494 = vld [vmem:[#allocation8 + $0xbc] sm:$0xf]
    %v495 = vld [vmem:[#allocation8 + $0xc0] sm:$0xf]
    %v496 = vld [vmem:[#allocation8 + $0xc4] sm:$0xf]
    %v497 = vld [vmem:[#allocation8 + $0xc8] sm:$0xf]
    %v498 = vld [vmem:[#allocation8 + $0xcc] sm:$0xf]
    %v499 = vld [vmem:[#allocation8 + $0xd0] sm:$0xf]
    %v500 = vld [vmem:[#allocation8 + $0xd4] sm:$0xf]
    %v501 = vld [vmem:[#allocation8 + $0xd8] sm:$0xf]
    %v502 = vld [vmem:[#allocation8 + $0xdc] sm:$0xf]
    %v503 = vld [vmem:[#allocation8 + $0xe0] sm:$0xf]
    %v504 = vld [vmem:[#allocation8 + $0xe4] sm:$0xf]
    %v505 = vld [vmem:[#allocation8 + $0xe8] sm:$0xf]
    %v506 = vld [vmem:[#allocation8 + $0xec] sm:$0xf]
    %v507 = vld [vmem:[#allocation8 + $0xf0] sm:$0xf]
    %v508 = vld [vmem:[#allocation8 + $0xf4] sm:$0xf]
    %v509 = vld [vmem:[#allocation8 + $0xf8] sm:$0xf]
    %v510 = vld [vmem:[#allocation8 + $0xfc] sm:$0xf]
    %v575 = vunpack.c.l.b16 %v447
    %v576 = vunpack.c.l.b16 %v448
    %v577 = vunpack.c.l.b16 %v449
    %v578 = vunpack.c.l.b16 %v450
    %v579 = vunpack.c.l.b16 %v451
    %v580 = vunpack.c.l.b16 %v452
    %v581 = vunpack.c.l.b16 %v453
    %v582 = vunpack.c.l.b16 %v454
    %v583 = vunpack.c.l.b16 %v455
    %v584 = vunpack.c.l.b16 %v456
    %v585 = vunpack.c.l.b16 %v457
    %v586 = vunpack.c.l.b16 %v458
    %v587 = vunpack.c.l.b16 %v459
    %v588 = vunpack.c.l.b16 %v460
    %v589 = vunpack.c.l.b16 %v461
    %v590 = vunpack.c.l.b16 %v462
    %v591 = vunpack.c.l.b16 %v463
    %v592 = vunpack.c.l.b16 %v464
    %v593 = vunpack.c.l.b16 %v465
    %v594 = vunpack.c.l.b16 %v466
    %v595 = vunpack.c.l.b16 %v467
    %v596 = vunpack.c.l.b16 %v468
    %v597 = vunpack.c.l.b16 %v469
    %v598 = vunpack.c.l.b16 %v470
    %v599 = vunpack.c.l.b16 %v471
    %v600 = vunpack.c.l.b16 %v472
    %v601 = vunpack.c.l.b16 %v473
    %v602 = vunpack.c.l.b16 %v474
    %v603 = vunpack.c.l.b16 %v475
    %v604 = vunpack.c.l.b16 %v476
    %v605 = vunpack.c.l.b16 %v477
    %v606 = vunpack.c.l.b16 %v478
    %v607 = vunpack.c.l.b16 %v479
    %v608 = vunpack.c.l.b16 %v480
    %v609 = vunpack.c.l.b16 %v481
    %v610 = vunpack.c.l.b16 %v482
    %v611 = vunpack.c.l.b16 %v483
    %v612 = vunpack.c.l.b16 %v484
    %v613 = vunpack.c.l.b16 %v485
    %v614 = vunpack.c.l.b16 %v486
    %v615 = vunpack.c.l.b16 %v487
    %v616 = vunpack.c.l.b16 %v488
    %v617 = vunpack.c.l.b16 %v489
    %v618 = vunpack.c.l.b16 %v490
    %v619 = vunpack.c.l.b16 %v491
    %v620 = vunpack.c.l.b16 %v492
    %v621 = vunpack.c.l.b16 %v493
    %v622 = vunpack.c.l.b16 %v494
    %v623 = vunpack.c.l.b16 %v495
    %v624 = vunpack.c.l.b16 %v496
    %v625 = vunpack.c.l.b16 %v497
    %v626 = vunpack.c.l.b16 %v498
    %v627 = vunpack.c.l.b16 %v499
    %v628 = vunpack.c.l.b16 %v500
    %v629 = vunpack.c.l.b16 %v501
    %v630 = vunpack.c.l.b16 %v502
    %v631 = vunpack.c.l.b16 %v503
    %v632 = vunpack.c.l.b16 %v504
    %v633 = vunpack.c.l.b16 %v505
    %v634 = vunpack.c.l.b16 %v506
    %v635 = vunpack.c.l.b16 %v507
    %v636 = vunpack.c.l.b16 %v508
    %v637 = vunpack.c.l.b16 %v509
    %v638 = vunpack.c.l.b16 %v510
    %v639 = vpack.c.b16 %v576, %v575
    %v640 = vpack.c.b16 %v578, %v577
    %v641 = vpack.c.b16 %v580, %v579
    %v642 = vpack.c.b16 %v582, %v581
    %v643 = vpack.c.b16 %v584, %v583
    %v644 = vpack.c.b16 %v586, %v585
    %v645 = vpack.c.b16 %v588, %v587
    %v646 = vpack.c.b16 %v590, %v589
    %v647 = vpack.c.b16 %v592, %v591
    %v648 = vpack.c.b16 %v594, %v593
    %v649 = vpack.c.b16 %v596, %v595
    %v650 = vpack.c.b16 %v598, %v597
    %v651 = vpack.c.b16 %v600, %v599
    %v652 = vpack.c.b16 %v602, %v601
    %v653 = vpack.c.b16 %v604, %v603
    %v654 = vpack.c.b16 %v606, %v605
    %v655 = vpack.c.b16 %v608, %v607
    %v656 = vpack.c.b16 %v610, %v609
    %v657 = vpack.c.b16 %v612, %v611
    %v658 = vpack.c.b16 %v614, %v613
    %v659 = vpack.c.b16 %v616, %v615
    %v660 = vpack.c.b16 %v618, %v617
    %v661 = vpack.c.b16 %v620, %v619
    %v662 = vpack.c.b16 %v622, %v621
    %v663 = vpack.c.b16 %v624, %v623
    %v664 = vpack.c.b16 %v626, %v625
    %v665 = vpack.c.b16 %v628, %v627
    %v666 = vpack.c.b16 %v630, %v629
    %v667 = vpack.c.b16 %v632, %v631
    %v668 = vpack.c.b16 %v634, %v633
    %v669 = vpack.c.b16 %v636, %v635
    %v670 = vpack.c.b16 %v638, %v637
    %703 = vmatprep.subr.bf16.mxu0 0
    %704 = vmatpush1.bf16.msra.mxu0 %v639
    %705 = vmatprep.subr.bf16.mxu0 0
    %706 = vmatpush1.bf16.msra.mxu0 %v640
    %707 = vmatprep.subr.bf16.mxu0 0
    %708 = vmatpush1.bf16.msra.mxu0 %v641
    %709 = vmatprep.subr.bf16.mxu0 0
    %710 = vmatpush1.bf16.msra.mxu0 %v642
    %711 = vmatprep.subr.bf16.mxu0 0
    %712 = vmatpush1.bf16.msra.mxu0 %v643
    %713 = vmatprep.subr.bf16.mxu0 0
    %714 = vmatpush1.bf16.msra.mxu0 %v644
    %715 = vmatprep.subr.bf16.mxu0 0
    %716 = vmatpush1.bf16.msra.mxu0 %v645
    %717 = vmatprep.subr.bf16.mxu0 0
    %718 = vmatpush1.bf16.msra.mxu0 %v646
    %719 = vmatprep.subr.bf16.mxu0 0
    %720 = vmatpush1.bf16.msra.mxu0 %v647
    %721 = vmatprep.subr.bf16.mxu0 0
    %722 = vmatpush1.bf16.msra.mxu0 %v648
    %723 = vmatprep.subr.bf16.mxu0 0
    %724 = vmatpush1.bf16.msra.mxu0 %v649
    %725 = vmatprep.subr.bf16.mxu0 0
    %726 = vmatpush1.bf16.msra.mxu0 %v650
    %727 = vmatprep.subr.bf16.mxu0 0
    %728 = vmatpush1.bf16.msra.mxu0 %v651
    %729 = vmatprep.subr.bf16.mxu0 0
    %730 = vmatpush1.bf16.msra.mxu0 %v652
    %731 = vmatprep.subr.bf16.mxu0 0
    %732 = vmatpush1.bf16.msra.mxu0 %v653
    %733 = vmatprep.subr.bf16.mxu0 0
    %734 = vmatpush1.bf16.msra.mxu0 %v654
    %735 = vmatprep.mubr.bf16.mxu0 %v444
    %736 = vmatmul.mubr.bf16.gmra.mrb[0].mxu0 %v443
    %v737 = vpop.f32.mrb[0].mxu0
    %v738 = vadd.f32 0.0, %v737
    %v739 = vpop.f32.mrb[0].mxu0
    %v740 = vpop.f32.mrb[0].mxu0
    %v741 = vadd.f32 0.0, %v740
    %v742 = vpop.f32.mrb[0].mxu0
    %743 = vdwg.mxu0
    %744 = vmatprep.subr.bf16.mxu0 0
    %745 = vmatpush1.bf16.msra.mxu0 %v655
    %746 = vmatprep.subr.bf16.mxu0 0
    %747 = vmatpush1.bf16.msra.mxu0 %v656
    %748 = vmatprep.subr.bf16.mxu0 0
    %749 = vmatpush1.bf16.msra.mxu0 %v657
    %750 = vmatprep.subr.bf16.mxu0 0
    %751 = vmatpush1.bf16.msra.mxu0 %v658
    %752 = vmatprep.subr.bf16.mxu0 0
    %753 = vmatpush1.bf16.msra.mxu0 %v659
    %754 = vmatprep.subr.bf16.mxu0 0
    %755 = vmatpush1.bf16.msra.mxu0 %v660
    %756 = vmatprep.subr.bf16.mxu0 0
    %757 = vmatpush1.bf16.msra.mxu0 %v661
    %758 = vmatprep.subr.bf16.mxu0 0
    %759 = vmatpush1.bf16.msra.mxu0 %v662
    %760 = vmatprep.subr.bf16.mxu0 0
    %761 = vmatpush1.bf16.msra.mxu0 %v663
    %762 = vmatprep.subr.bf16.mxu0 0
    %763 = vmatpush1.bf16.msra.mxu0 %v664
    %764 = vmatprep.subr.bf16.mxu0 0
    %765 = vmatpush1.bf16.msra.mxu0 %v665
    %766 = vmatprep.subr.bf16.mxu0 0
    %767 = vmatpush1.bf16.msra.mxu0 %v666
    %768 = vmatprep.subr.bf16.mxu0 0
    %769 = vmatpush1.bf16.msra.mxu0 %v667
    %770 = vmatprep.subr.bf16.mxu0 0
    %771 = vmatpush1.bf16.msra.mxu0 %v668
    %772 = vmatprep.subr.bf16.mxu0 0
    %773 = vmatpush1.bf16.msra.mxu0 %v669
    %774 = vmatprep.subr.bf16.mxu0 0
    %775 = vmatpush1.bf16.msra.mxu0 %v670
    %776 = vmatprep.mubr.bf16.mxu0 %v446
    %777 = vmatmul.mubr.bf16.gmra.mrb[0].mxu0 %v445
    %v778 = vpop.f32.mrb[0].mxu0
    %v779 = vadd.f32 %v738, %v778
    %v780 = vpop.f32.mrb[0].mxu0
    %v781 = vpop.f32.mrb[0].mxu0
    %v782 = vadd.f32 %v741, %v781
    %v783 = vpop.f32.mrb[0].mxu0
    %784 = vdwg.mxu0
    %785 = vst [vmem:[#allocation2] sm:$0xff] %v779
    %786 = vst [vmem:[#allocation2 + $0x8] sm:$0xff] %v782
    %v787 = vld [vmem:[#allocation2] sm:$0xff]
    %v788 = vld [vmem:[#allocation2 + $0x8] sm:$0xff]
    %v789 = vld [vmem:[%s4] sm:$0x1]
    %v791 = vlaneseq
    %v792 = vshrl.u32 %v791, 7
    %v793 = vsub.s32 0, %v792
    %v794 = vrot.slane %v789, %v793
    %v796 = vadd.f32 %v787, %v794
    %v797 = vadd.f32 %v788, %v794
    %798 = vst [vmem:[#allocation9] sm:$0xff] %v796
    %799 = vst [vmem:[#allocation9 + $0x8] sm:$0xff] %v797
    // Predicated region
    $region34: #{tpu_custom_call.1} parent=1 // pred_check
      _
    $region35: #{tpu_custom_call.1} parent=1 // pred_check_branch
      %801 = sbr.rel (0) target = $region37
    $region36: #{tpu_custom_call.1} parent=1 // pred_region
      %s803 = ssub.s32 256, 256
      %804 = vsyncadd [#allocation5], %s803
      %s805 = sshll.u32 [#allocation9], 4
      %s806 = int_to_ptr.vmem [resolvable:$true] %s805
      %811 = dma.vmem_to_hbm [thread:$0]  %s806, 256, %s5, [#allocation5], 128, 128, 8
    $region37: #{tpu_custom_call.1} parent=1 // pred_fallthru
      _
    // Predicated region
    $region38: #{tpu_custom_call.1} parent=1 // pred_check
      _
    $region39: #{tpu_custom_call.1} parent=1 // pred_check_branch
      %813 = sbr.rel (0) target = $region41
    $region40: #{tpu_custom_call.1} parent=1 // pred_region
      %814 = dma.done [#allocation5], 256
    $region41: #{tpu_custom_call.1} parent=1 // pred_fallthru
      _
    %815 = vsyncpa [#allocation4], 1
    %816 = vsyncpa [#allocation7], 1
    %817 = vsyncpa [#allocation5], 1

// kernel: tpu_custom_call.1
$region0: #{tpu_custom_call.1}
  #allocation0 [shape = 'u32[]', space=smem, size = 0x4, offset = 0x4, fixed_abs, tag = 'smem constant byte address 0x4 - core index']
  #allocation1 [shape = 'u32[144,128]{1,0:T(1,128)}', space=vmem, size = 0x12000, scoped, tag = 'internal scratch']
  #allocation2 [shape = 'f32[16,128]{1,0:T(8,128)}', space=vmem, size = 0x2000, scoped, tag = 'scratch operand']
  %s0 = inlined_call_operand.hbm [shape: bf16[16,128], index: 0, kind: input, shape index: {}]
  %s1 = inlined_call_operand.hbm [shape: bf16[128,512], index: 1, kind: input, shape index: {}]
  %s2 = inlined_call_operand.vmem [shape: f32[1,512], index: 2, kind: input, shape index: {}]
  %s3 = inlined_call_operand.hbm [shape: bf16[512,128], index: 3, kind: input, shape index: {}]
  %s4 = inlined_call_operand.vmem [shape: f32[1,128], index: 4, kind: input, shape index: {}]
  %s5 = inlined_call_operand.hbm [shape: f32[16,128], index: 5, kind: output, shape index: {}]
  %s6 = sld [smem:[#allocation0]]
  $region42: #{tpu_custom_call.1} parent=0
    _
  %s8 = ssub.s32 1, %s6
  %s9 = scalar_select 0, %s8, %s6
  $region1: #{tpu_custom_call.1} parent=0
    #allocation3 [shape = 'u8[4096]{0}', space=vmem, size = 0x1000, scoped, tag = 'input window, operand 0, single buffered']
    #allocation4 [shape = 's32[1]{0}', space=sflag, size = 0x4, scoped, tag = 'scoped memory for tpu_custom_call.1']
    #allocation5 [shape = 's32[1]{0}', space=sflag, size = 0x4, scoped, tag = 'scoped memory for tpu_custom_call.1']
    #allocation6 [shape = 'u8[131072]{0}', space=vmem, size = 0x20000, scoped, tag = 'input window, operand 1, single buffered']
    #allocation7 [shape = 's32[1]{0}', space=sflag, size = 0x4, scoped, tag = 'scoped memory for tpu_custom_call.1']
    #allocation8 [shape = 'u8[131072]{0}', space=vmem, size = 0x20000, scoped, tag = 'input window, operand 3, single buffered']
    #allocation9 [shape = 'u8[8192]{0}', space=vmem, size = 0x2000, scoped, tag = 'output window, operand 0, single buffered']
    %10 = vsyncpa [#allocation4], 0
    %11 = vsyncpa [#allocation7], 0
    %12 = vsyncpa [#allocation5], 0
    // Predicated region
    $region2: #{tpu_custom_call.1} parent=1 // pred_check
      _
    $region3: #{tpu_custom_call.1} parent=1 // pred_check_branch
      %14 = sbr.rel (0) target = $region5
    $region4: #{tpu_custom_call.1} parent=1 // pred_region
      %s16 = ssub.s32 128, 128
      %17 = vsyncadd [#allocation4], %s16
      %s18 = sshll.u32 [#allocation3], 4
      %s19 = int_to_ptr.vmem [resolvable:$true] %s18
      %24 = dma.hbm_to_vmem [thread:$0]  %s0, 128, %s19, [#allocation4], 64, 64, 4
    $region5: #{tpu_custom_call.1} parent=1 // pred_fallthru
      _
    // Predicated region
    $region6: #{tpu_custom_call.1} parent=1 // pred_check
      _
    $region7: #{tpu_custom_call.1} parent=1 // pred_check_branch
      %26 = sbr.rel (0) target = $region9
    $region8: #{tpu_custom_call.1} parent=1 // pred_region
      %s28 = ssub.s32 4096, 4096
      %29 = vsyncadd [#allocation7], %s28
      %s30 = sshll.u32 [#allocation6], 4
      %s31 = int_to_ptr.vmem [resolvable:$true] %s30
      %36 = dma.hbm_to_vmem [thread:$0]  %s1, 4096, %s31, [#allocation7], 256, 256, 16
    $region9: #{tpu_custom_call.1} parent=1 // pred_fallthru
      _
    // Predicated region
    $region10: #{tpu_custom_call.1} parent=1 // pred_check
      _
    $region11: #{tpu_custom_call.1} parent=1 // pred_check_branch
      %38 = sbr.rel (0) target = $region13
    $region12: #{tpu_custom_call.1} parent=1 // pred_region
      _
    $region13: #{tpu_custom_call.1} parent=1 // pred_fallthru
      _
    // Predicated region
    $region14: #{tpu_custom_call.1} parent=1 // pred_check
      _
    $region15: #{tpu_custom_call.1} parent=1 // pred_check_branch
      %40 = sbr.rel (0) target = $region17
    $region16: #{tpu_custom_call.1} parent=1 // pred_region
      %s42 = ssub.s32 4096, 4096
      %43 = vsyncadd [#allocation7], %s42
      %s44 = sshll.u32 [#allocation8], 4
      %s45 = int_to_ptr.vmem [resolvable:$true] %s44
      %50 = dma.hbm_to_vmem [thread:$0]  %s3, 4096, %s45, [#allocation7], 64, 64, 4
    $region17: #{tpu_custom_call.1} parent=1 // pred_fallthru
      _
    // Predicated region
    $region18: #{tpu_custom_call.1} parent=1 // pred_check
      _
    $region19: #{tpu_custom_call.1} parent=1 // pred_check_branch
      %52 = sbr.rel (0) target = $region21
    $region20: #{tpu_custom_call.1} parent=1 // pred_region
      _
    $region21: #{tpu_custom_call.1} parent=1 // pred_fallthru
      _
    // Predicated region
    $region22: #{tpu_custom_call.1} parent=1 // pred_check
      _
    $region23: #{tpu_custom_call.1} parent=1 // pred_check_branch
      %54 = sbr.rel (0) target = $region25
    $region24: #{tpu_custom_call.1} parent=1 // pred_region
      %55 = dma.done [#allocation4], 128
    $region25: #{tpu_custom_call.1} parent=1 // pred_fallthru
      _
    // Predicated region
    $region26: #{tpu_custom_call.1} parent=1 // pred_check
      _
    $region27: #{tpu_custom_call.1} parent=1 // pred_check_branch
      %57 = sbr.rel (0) target = $region29
    $region28: #{tpu_custom_call.1} parent=1 // pred_region
      %58 = dma.done [#allocation7], 4096
    $region29: #{tpu_custom_call.1} parent=1 // pred_fallthru
      _
    // Predicated region
    $region30: #{tpu_custom_call.1} parent=1 // pred_check
      _
    $region31: #{tpu_custom_call.1} parent=1 // pred_check_branch
      %60 = sbr.rel (0) target = $region33
    $region32: #{tpu_custom_call.1} parent=1 // pred_region
      %61 = dma.done [#allocation7], 4096
    $region33: #{tpu_custom_call.1} parent=1 // pred_fallthru
      _
    %v63 = vld [vmem:[#allocation3] sm:$0xf]
    %v64 = vld [vmem:[#allocation3 + $0x4] sm:$0xf]
    %v65 = vld [vmem:[#allocation6] sm:$0xff]
    %v66 = vld [vmem:[#allocation6 + $0x8] sm:$0xff]
    %v67 = vld [vmem:[#allocation6 + $0x10] sm:$0xff]
    %v68 = vld [vmem:[#allocation6 + $0x18] sm:$0xff]
    %v69 = vld [vmem:[#allocation6 + $0x20] sm:$0xff]
    %v70 = vld [vmem:[#allocation6 + $0x28] sm:$0xff]
    %v71 = vld [vmem:[#allocation6 + $0x30] sm:$0xff]
    %v72 = vld [vmem:[#allocation6 + $0x38] sm:$0xff]
    %v73 = vld [vmem:[#allocation6 + $0x40] sm:$0xff]
    %v74 = vld [vmem:[#allocation6 + $0x48] sm:$0xff]
    %v75 = vld [vmem:[#allocation6 + $0x50] sm:$0xff]
    %v76 = vld [vmem:[#allocation6 + $0x58] sm:$0xff]
    %v77 = vld [vmem:[#allocation6 + $0x60] sm:$0xff]
    %v78 = vld [vmem:[#allocation6 + $0x68] sm:$0xff]
    %v79 = vld [vmem:[#allocation6 + $0x70] sm:$0xff]
    %v80 = vld [vmem:[#allocation6 + $0x78] sm:$0xff]
    %v81 = vld [vmem:[#allocation6 + $0x80] sm:$0xff]
    %v82 = vld [vmem:[#allocation6 + $0x88] sm:$0xff]
    %v83 = vld [vmem:[#allocation6 + $0x90] sm:$0xff]
    %v84 = vld [vmem:[#allocation6 + $0x98] sm:$0xff]
    %v85 = vld [vmem:[#allocation6 + $0xa0] sm:$0xff]
    %v86 = vld [vmem:[#allocation6 + $0xa8] sm:$0xff]
    %v87 = vld [vmem:[#allocation6 + $0xb0] sm:$0xff]
    %v88 = vld [vmem:[#allocation6 + $0xb8] sm:$0xff]
    %v89 = vld [vmem:[#allocation6 + $0xc0] sm:$0xff]
    %v90 = vld [vmem:[#allocation6 + $0xc8] sm:$0xff]
    %v91 = vld [vmem:[#allocation6 + $0xd0] sm:$0xff]
    %v92 = vld [vmem:[#allocation6 + $0xd8] sm:$0xff]
    %v93 = vld [vmem:[#allocation6 + $0xe0] sm:$0xff]
    %v94 = vld [vmem:[#allocation6 + $0xe8] sm:$0xff]
    %v95 = vld [vmem:[#allocation6 + $0xf0] sm:$0xff]
    %v96 = vld [vmem:[#allocation6 + $0xf8] sm:$0xff]
    %v97 = vld [vmem:[%s2] sm:$0xf]
    %v99 = vlaneseq
    %v100 = vshrl.u32 %v99, 7
    %v101 = vsub.s32 0, %v100
    %v102 = vrot.slane %v97, %v101
    %v103 = vlaneseq
    %v104 = vshrl.u32 %v103, 7
    %v105 = vsub.s32 1, %v104
    %v106 = vrot.slane %v97, %v105
    %v107 = vlaneseq
    %v108 = vshrl.u32 %v107, 7
    %v109 = vsub.s32 2, %v108
    %v110 = vrot.slane %v97, %v109
    %v111 = vlaneseq
    %v112 = vshrl.u32 %v111, 7
    %v113 = vsub.s32 3, %v112
    %v114 = vrot.slane %v97, %v113
    %v121 = vunpack.c.l.b16 %v63
    %v122 = vunpack.c.l.b16 %v64
    %v123 = vpack.c.b16 %v122, %v121
    %v157 = vunpack.c.l.b16 %v65
    %v158 = vunpack.c.h.b16 %v65
    %v159 = vunpack.c.l.b16 %v66
    %v160 = vunpack.c.h.b16 %v66
    %v161 = vunpack.c.l.b16 %v67
    %v162 = vunpack.c.h.b16 %v67
    %v163 = vunpack.c.l.b16 %v68
    %v164 = vunpack.c.h.b16 %v68
    %v165 = vunpack.c.l.b16 %v69
    %v166 = vunpack.c.h.b16 %v69
    %v167 = vunpack.c.l.b16 %v70
    %v168 = vunpack.c.h.b16 %v70
    %v169 = vunpack.c.l.b16 %v71
    %v170 = vunpack.c.h.b16 %v71
    %v171 = vunpack.c.l.b16 %v72
    %v172 = vunpack.c.h.b16 %v72
    %v173 = vunpack.c.l.b16 %v73
    %v174 = vunpack.c.h.b16 %v73
    %v175 = vunpack.c.l.b16 %v74
    %v176 = vunpack.c.h.b16 %v74
    %v177 = vunpack.c.l.b16 %v75
    %v178 = vunpack.c.h.b16 %v75
    %v179 = vunpack.c.l.b16 %v76
    %v180 = vunpack.c.h.b16 %v76
    %v181 = vunpack.c.l.b16 %v77
    %v182 = vunpack.c.h.b16 %v77
    %v183 = vunpack.c.l.b16 %v78
    %v184 = vunpack.c.h.b16 %v78
    %v185 = vunpack.c.l.b16 %v79
    %v186 = vunpack.c.h.b16 %v79
    %v187 = vunpack.c.l.b16 %v80
    %v188 = vunpack.c.h.b16 %v80
    %v189 = vunpack.c.l.b16 %v81
    %v190 = vunpack.c.h.b16 %v81
    %v191 = vunpack.c.l.b16 %v82
    %v192 = vunpack.c.h.b16 %v82
    %v193 = vunpack.c.l.b16 %v83
    %v194 = vunpack.c.h.b16 %v83
    %v195 = vunpack.c.l.b16 %v84
    %v196 = vunpack.c.h.b16 %v84
    %v197 = vunpack.c.l.b16 %v85
    %v198 = vunpack.c.h.b16 %v85
    %v199 = vunpack.c.l.b16 %v86
    %v200 = vunpack.c.h.b16 %v86
    %v201 = vunpack.c.l.b16 %v87
    %v202 = vunpack.c.h.b16 %v87
    %v203 = vunpack.c.l.b16 %v88
    %v204 = vunpack.c.h.b16 %v88
    %v205 = vunpack.c.l.b16 %v89
    %v206 = vunpack.c.h.b16 %v89
    %v207 = vunpack.c.l.b16 %v90
    %v208 = vunpack.c.h.b16 %v90
    %v209 = vunpack.c.l.b16 %v91
    %v210 = vunpack.c.h.b16 %v91
    %v211 = vunpack.c.l.b16 %v92
    %v212 = vunpack.c.h.b16 %v92
    %v213 = vunpack.c.l.b16 %v93
    %v214 = vunpack.c.h.b16 %v93
    %v215 = vunpack.c.l.b16 %v94
    %v216 = vunpack.c.h.b16 %v94
    %v217 = vunpack.c.l.b16 %v95
    %v218 = vunpack.c.h.b16 %v95
    %v219 = vunpack.c.l.b16 %v96
    %v220 = vunpack.c.h.b16 %v96
    %v221 = vpack.c.b16 %v161, %v157
    %v222 = vpack.c.b16 %v162, %v158
    %v223 = vpack.c.b16 %v163, %v159
    %v224 = vpack.c.b16 %v164, %v160
    %v225 = vpack.c.b16 %v169, %v165
    %v226 = vpack.c.b16 %v170, %v166
    %v227 = vpack.c.b16 %v171, %v167
    %v228 = vpack.c.b16 %v172, %v168
    %v229 = vpack.c.b16 %v177, %v173
    %v230 = vpack.c.b16 %v178, %v174
    %v231 = vpack.c.b16 %v179, %v175
    %v232 = vpack.c.b16 %v180, %v176
    %v233 = vpack.c.b16 %v185, %v181
    %v234 = vpack.c.b16 %v186, %v182
    %v235 = vpack.c.b16 %v187, %v183
    %v236 = vpack.c.b16 %v188, %v184
    %v237 = vpack.c.b16 %v193, %v189
    %v238 = vpack.c.b16 %v194, %v190
    %v239 = vpack.c.b16 %v195, %v191
    %v240 = vpack.c.b16 %v196, %v192
    %v241 = vpack.c.b16 %v201, %v197
    %v242 = vpack.c.b16 %v202, %v198
    %v243 = vpack.c.b16 %v203, %v199
    %v244 = vpack.c.b16 %v204, %v200
    %v245 = vpack.c.b16 %v209, %v205
    %v246 = vpack.c.b16 %v210, %v206
    %v247 = vpack.c.b16 %v211, %v207
    %v248 = vpack.c.b16 %v212, %v208
    %v249 = vpack.c.b16 %v217, %v213
    %v250 = vpack.c.b16 %v218, %v214
    %v251 = vpack.c.b16 %v219, %v215
    %v252 = vpack.c.b16 %v220, %v216
    %285 = vmatprep.subr.bf16.mxu0 %v222
    %286 = vmatpush1.bf16.msra.mxu0 %v221
    %287 = vmatprep.subr.bf16.mxu0 %v226
    %288 = vmatpush1.bf16.msra.mxu0 %v225
    %289 = vmatprep.subr.bf16.mxu0 %v230
    %290 = vmatpush1.bf16.msra.mxu0 %v229
    %291 = vmatprep.subr.bf16.mxu0 %v234
    %292 = vmatpush1.bf16.msra.mxu0 %v233
    %293 = vmatprep.subr.bf16.mxu0 %v238
    %294 = vmatpush1.bf16.msra.mxu0 %v237
    %295 = vmatprep.subr.bf16.mxu0 %v242
    %296 = vmatpush1.bf16.msra.mxu0 %v241
    %297 = vmatprep.subr.bf16.mxu0 %v246
    %298 = vmatpush1.bf16.msra.mxu0 %v245
    %299 = vmatprep.subr.bf16.mxu0 %v250
    %300 = vmatpush1.bf16.msra.mxu0 %v249
    %301 = vmatprep.subr.bf16.mxu0 0
    %302 = vmatpush1.bf16.msra.mxu0 0
    %303 = vmatprep.subr.bf16.mxu0 0
    %304 = vmatpush1.bf16.msra.mxu0 0
    %305 = vmatprep.subr.bf16.mxu0 0
    %306 = vmatpush1.bf16.msra.mxu0 0
    %307 = vmatprep.subr.bf16.mxu0 0
    %308 = vmatpush1.bf16.msra.mxu0 0
    %309 = vmatprep.subr.bf16.mxu0 0
    %310 = vmatpush1.bf16.msra.mxu0 0
    %311 = vmatprep.subr.bf16.mxu0 0
    %312 = vmatpush1.bf16.msra.mxu0 0
    %313 = vmatprep.subr.bf16.mxu0 0
    %314 = vmatpush1.bf16.msra.mxu0 0
    %315 = vmatprep.subr.bf16.mxu0 0
    %316 = vmatpush1.bf16.msra.mxu0 0
    %317 = vmatprep.mubr.bf16.mxu0 0
    %318 = vmatmul.mubr.bf16.gmra.mrb[0].mxu0 %v123
    %v319 = vpop.f32.mrb[0].mxu0
    %v320 = vadd.f32 %v102, %v319
    %v321 = vpop.f32.mrb[0].mxu0
    %v322 = vadd.f32 %v106, %v321
    %v323 = vpop.f32.mrb[0].mxu0
    %v324 = vadd.f32 %v102, %v323
    %v325 = vpop.f32.mrb[0].mxu0
    %v326 = vadd.f32 %v106, %v325
    %327 = vdwg.mxu0
    %328 = vmatprep.subr.bf16.mxu0 %v224
    %329 = vmatpush1.bf16.msra.mxu0 %v223
    %330 = vmatprep.subr.bf16.mxu0 %v228
    %331 = vmatpush1.bf16.msra.mxu0 %v227
    %332 = vmatprep.subr.bf16.mxu0 %v232
    %333 = vmatpush1.bf16.msra.mxu0 %v231
    %334 = vmatprep.subr.bf16.mxu0 %v236
    %335 = vmatpush1.bf16.msra.mxu0 %v235
    %336 = vmatprep.subr.bf16.mxu0 %v240
    %337 = vmatpush1.bf16.msra.mxu0 %v239
    %338 = vmatprep.subr.bf16.mxu0 %v244
    %339 = vmatpush1.bf16.msra.mxu0 %v243
    %340 = vmatprep.subr.bf16.mxu0 %v248
    %341 = vmatpush1.bf16.msra.mxu0 %v247
    %342 = vmatprep.subr.bf16.mxu0 %v252
    %343 = vmatpush1.bf16.msra.mxu0 %v251
    %344 = vmatprep.subr.bf16.mxu0 0
    %345 = vmatpush1.bf16.msra.mxu0 0
    %346 = vmatprep.subr.bf16.mxu0 0
    %347 = vmatpush1.bf16.msra.mxu0 0
    %348 = vmatprep.subr.bf16.mxu0 0
    %349 = vmatpush1.bf16.msra.mxu0 0
    %350 = vmatprep.subr.bf16.mxu0 0
    %351 = vmatpush1.bf16.msra.mxu0 0
    %352 = vmatprep.subr.bf16.mxu0 0
    %353 = vmatpush1.bf16.msra.mxu0 0
    %354 = vmatprep.subr.bf16.mxu0 0
    %355 = vmatpush1.bf16.msra.mxu0 0
    %356 = vmatprep.subr.bf16.mxu0 0
    %357 = vmatpush1.bf16.msra.mxu0 0
    %358 = vmatprep.subr.bf16.mxu0 0
    %359 = vmatpush1.bf16.msra.mxu0 0
    %360 = vmatprep.mubr.bf16.mxu0 0
    %361 = vmatmul.mubr.bf16.gmra.mrb[0].mxu0 %v123
    %v362 = vpop.f32.mrb[0].mxu0
    %v363 = vadd.f32 %v110, %v362
    %v364 = vpop.f32.mrb[0].mxu0
    %v365 = vadd.f32 %v114, %v364
    %v366 = vpop.f32.mrb[0].mxu0
    %v367 = vadd.f32 %v110, %v366
    %v368 = vpop.f32.mrb[0].mxu0
    %v369 = vadd.f32 %v114, %v368
    %370 = vdwg.mxu0
    %v371 = vmul.f32 %v320, %v320
    %v372 = vmul.f32 %v322, %v322
    %v373 = vmul.f32 %v363, %v363
    %v374 = vmul.f32 %v365, %v365
    %v375 = vmul.f32 %v324, %v324
    %v376 = vmul.f32 %v326, %v326
    %v377 = vmul.f32 %v367, %v367
    %v378 = vmul.f32 %v369, %v369
    %v379 = vmul.f32 %v320, 0.7978846
    %v380 = vmul.f32 %v322, 0.7978846
    %v381 = vmul.f32 %v363, 0.7978846
    %v382 = vmul.f32 %v365, 0.7978846
    %v383 = vmul.f32 %v324, 0.7978846
    %v384 = vmul.f32 %v326, 0.7978846
    %v385 = vmul.f32 %v367, 0.7978846
    %v386 = vmul.f32 %v369, 0.7978846
    %v387 = vmul.f32 %v371, 0.044715
    %v388 = vmul.f32 %v372, 0.044715
    %v389 = vmul.f32 %v373, 0.044715
    %v390 = vmul.f32 %v374, 0.044715
    %v391 = vmul.f32 %v375, 0.044715
    %v392 = vmul.f32 %v376, 0.044715
    %v393 = vmul.f32 %v377, 0.044715
    %v394 = vmul.f32 %v378, 0.044715
    %v395 = vadd.f32 %v387, 1.0
    %v396 = vadd.f32 %v388, 1.0
    %v397 = vadd.f32 %v389, 1.0
    %v398 = vadd.f32 %v390, 1.0
    %v399 = vadd.f32 %v391, 1.0
    %v400 = vadd.f32 %v392, 1.0
    %v401 = vadd.f32 %v393, 1.0
    %v402 = vadd.f32 %v394, 1.0
    %v403 = vmul.f32 %v379, %v395
    %v404 = vmul.f32 %v380, %v396
    %v405 = vmul.f32 %v381, %v397
    %v406 = vmul.f32 %v382, %v398
    %v407 = vmul.f32 %v383, %v399
    %v408 = vmul.f32 %v384, %v400
    %v409 = vmul.f32 %v385, %v401
    %v410 = vmul.f32 %v386, %v402
    %v411 = vtanh.pop %v403
    %v412 = vtanh.pop %v404
    %v413 = vtanh.pop %v405
    %v414 = vtanh.pop %v406
    %v415 = vtanh.pop %v407
    %v416 = vtanh.pop %v408
    %v417 = vtanh.pop %v409
    %v418 = vtanh.pop %v410
    %v419 = vmul.f32 %v320, 0.5
    %v420 = vmul.f32 %v322, 0.5
    %v421 = vmul.f32 %v363, 0.5
    %v422 = vmul.f32 %v365, 0.5
    %v423 = vmul.f32 %v324, 0.5
    %v424 = vmul.f32 %v326, 0.5
    %v425 = vmul.f32 %v367, 0.5
    %v426 = vmul.f32 %v369, 0.5
    %v427 = vadd.f32 %v411, 1.0
    %v428 = vadd.f32 %v412, 1.0
    %v429 = vadd.f32 %v413, 1.0
    %v430 = vadd.f32 %v414, 1.0
    %v431 = vadd.f32 %v415, 1.0
    %v432 = vadd.f32 %v416, 1.0
    %v433 = vadd.f32 %v417, 1.0
    %v434 = vadd.f32 %v418, 1.0
    %v435 = vmul.f32 %v419, %v427
    %v436 = vmul.f32 %v420, %v428
    %v437 = vmul.f32 %v421, %v429
    %v438 = vmul.f32 %v422, %v430
    %v439 = vmul.f32 %v423, %v431
    %v440 = vmul.f32 %v424, %v432
    %v441 = vmul.f32 %v425, %v433
    %v442 = vmul.f32 %v426, %v434
    %v443 = vpack.c.bf16 %v439, %v435
    %v444 = vpack.c.bf16 %v440, %v436
    %v445 = vpack.c.bf16 %v441, %v437
    %v446 = vpack.c.bf16 %v442, %v438
    %v447 = vld [vmem:[#allocation8] sm:$0xf]
    %v448 = vld [vmem:[#allocation8 + $0x4] sm:$0xf]
    %v449 = vld [vmem:[#allocation8 + $0x8] sm:$0xf]
    %v450 = vld [vmem:[#allocation8 + $0xc] sm:$0xf]
    %v451 = vld [vmem:[#allocation8 + $0x10] sm:$0xf]
    %v452 = vld [vmem:[#allocation8 + $0x14] sm:$0xf]
    %v453 = vld [vmem:[#allocation8 + $0x18] sm:$0xf]
    %v454 = vld [vmem:[#allocation8 + $0x1c] sm:$0xf]
    %v455 = vld [vmem:[#allocation8 + $0x20] sm:$0xf]
    %v456 = vld [vmem:[#allocation8 + $0x24] sm:$0xf]
    %v457 = vld [vmem:[#allocation8 + $0x28] sm:$0xf]
    %v458 = vld [vmem:[#allocation8 + $0x2c] sm:$0xf]
    %v459 = vld [vmem:[#allocation8 + $0x30] sm:$0xf]
    %v460 = vld [vmem:[#allocation8 + $0x34] sm:$0xf]
    %v461 = vld [vmem:[#allocation8 + $0x38] sm:$0xf]
    %v462 = vld [vmem:[#allocation8 + $0x3c] sm:$0xf]
    %v463 = vld [vmem:[#allocation8 + $0x40] sm:$0xf]
    %v464 = vld [vmem:[#allocation8 + $0x44] sm:$0xf]
    %v465 = vld [vmem:[#allocation8 + $0x48] sm:$0xf]
    %v466 = vld [vmem:[#allocation8 + $0x4c] sm:$0xf]
    %v467 = vld [vmem:[#allocation8 + $0x50] sm:$0xf]
    %v468 = vld [vmem:[#allocation8 + $0x54] sm:$0xf]
    %v469 = vld [vmem:[#allocation8 + $0x58] sm:$0xf]
    %v470 = vld [vmem:[#allocation8 + $0x5c] sm:$0xf]
    %v471 = vld [vmem:[#allocation8 + $0x60] sm:$0xf]
    %v472 = vld [vmem:[#allocation8 + $0x64] sm:$0xf]
    %v473 = vld [vmem:[#allocation8 + $0x68] sm:$0xf]
    %v474 = vld [vmem:[#allocation8 + $0x6c] sm:$0xf]
    %v475 = vld [vmem:[#allocation8 + $0x70] sm:$0xf]
    %v476 = vld [vmem:[#allocation8 + $0x74] sm:$0xf]
    %v477 = vld [vmem:[#allocation8 + $0x78] sm:$0xf]
    %v478 = vld [vmem:[#allocation8 + $0x7c] sm:$0xf]
    %v479 = vld [vmem:[#allocation8 + $0x80] sm:$0xf]
    %v480 = vld [vmem:[#allocation8 + $0x84] sm:$0xf]
    %v481 = vld [vmem:[#allocation8 + $0x88] sm:$0xf]
    %v482 = vld [vmem:[#allocation8 + $0x8c] sm:$0xf]
    %v483 = vld [vmem:[#allocation8 + $0x90] sm:$0xf]
    %v484 = vld [vmem:[#allocation8 + $0x94] sm:$0xf]
    %v485 = vld [vmem:[#allocation8 + $0x98] sm:$0xf]
    %v486 = vld [vmem:[#allocation8 + $0x9c] sm:$0xf]
    %v487 = vld [vmem:[#allocation8 + $0xa0] sm:$0xf]
    %v488 = vld [vmem:[#allocation8 + $0xa4] sm:$0xf]
    %v489 = vld [vmem:[#allocation8 + $0xa8] sm:$0xf]
    %v490 = vld [vmem:[#allocation8 + $0xac] sm:$0xf]
    %v491 = vld [vmem:[#allocation8 + $0xb0] sm:$0xf]
    %v492 = vld [vmem:[#allocation8 + $0xb4] sm:$0xf]
    %v493 = vld [vmem:[#allocation8 + $0xb8] sm:$0xf]
    %v494 = vld [vmem:[#allocation8 + $0xbc] sm:$0xf]
    %v495 = vld [vmem:[#allocation8 + $0xc0] sm:$0xf]
    %v496 = vld [vmem:[#allocation8 + $0xc4] sm:$0xf]
    %v497 = vld [vmem:[#allocation8 + $0xc8] sm:$0xf]
    %v498 = vld [vmem:[#allocation8 + $0xcc] sm:$0xf]
    %v499 = vld [vmem:[#allocation8 + $0xd0] sm:$0xf]
    %v500 = vld [vmem:[#allocation8 + $0xd4] sm:$0xf]
    %v501 = vld [vmem:[#allocation8 + $0xd8] sm:$0xf]
    %v502 = vld [vmem:[#allocation8 + $0xdc] sm:$0xf]
    %v503 = vld [vmem:[#allocation8 + $0xe0] sm:$0xf]
    %v504 = vld [vmem:[#allocation8 + $0xe4] sm:$0xf]
    %v505 = vld [vmem:[#allocation8 + $0xe8] sm:$0xf]
    %v506 = vld [vmem:[#allocation8 + $0xec] sm:$0xf]
    %v507 = vld [vmem:[#allocation8 + $0xf0] sm:$0xf]
    %v508 = vld [vmem:[#allocation8 + $0xf4] sm:$0xf]
    %v509 = vld [vmem:[#allocation8 + $0xf8] sm:$0xf]
    %v510 = vld [vmem:[#allocation8 + $0xfc] sm:$0xf]
    %v575 = vunpack.c.l.b16 %v447
    %v576 = vunpack.c.l.b16 %v448
    %v577 = vunpack.c.l.b16 %v449
    %v578 = vunpack.c.l.b16 %v450
    %v579 = vunpack.c.l.b16 %v451
    %v580 = vunpack.c.l.b16 %v452
    %v581 = vunpack.c.l.b16 %v453
    %v582 = vunpack.c.l.b16 %v454
    %v583 = vunpack.c.l.b16 %v455
    %v584 = vunpack.c.l.b16 %v456
    %v585 = vunpack.c.l.b16 %v457
    %v586 = vunpack.c.l.b16 %v458
    %v587 = vunpack.c.l.b16 %v459
    %v588 = vunpack.c.l.b16 %v460
    %v589 = vunpack.c.l.b16 %v461
    %v590 = vunpack.c.l.b16 %v462
    %v591 = vunpack.c.l.b16 %v463
    %v592 = vunpack.c.l.b16 %v464
    %v593 = vunpack.c.l.b16 %v465
    %v594 = vunpack.c.l.b16 %v466
    %v595 = vunpack.c.l.b16 %v467
    %v596 = vunpack.c.l.b16 %v468
    %v597 = vunpack.c.l.b16 %v469
    %v598 = vunpack.c.l.b16 %v470
    %v599 = vunpack.c.l.b16 %v471
    %v600 = vunpack.c.l.b16 %v472
    %v601 = vunpack.c.l.b16 %v473
    %v602 = vunpack.c.l.b16 %v474
    %v603 = vunpack.c.l.b16 %v475
    %v604 = vunpack.c.l.b16 %v476
    %v605 = vunpack.c.l.b16 %v477
    %v606 = vunpack.c.l.b16 %v478
    %v607 = vunpack.c.l.b16 %v479
    %v608 = vunpack.c.l.b16 %v480
    %v609 = vunpack.c.l.b16 %v481
    %v610 = vunpack.c.l.b16 %v482
    %v611 = vunpack.c.l.b16 %v483
    %v612 = vunpack.c.l.b16 %v484
    %v613 = vunpack.c.l.b16 %v485
    %v614 = vunpack.c.l.b16 %v486
    %v615 = vunpack.c.l.b16 %v487
    %v616 = vunpack.c.l.b16 %v488
    %v617 = vunpack.c.l.b16 %v489
    %v618 = vunpack.c.l.b16 %v490
    %v619 = vunpack.c.l.b16 %v491
    %v620 = vunpack.c.l.b16 %v492
    %v621 = vunpack.c.l.b16 %v493
    %v622 = vunpack.c.l.b16 %v494
    %v623 = vunpack.c.l.b16 %v495
    %v624 = vunpack.c.l.b16 %v496
    %v625 = vunpack.c.l.b16 %v497
    %v626 = vunpack.c.l.b16 %v498
    %v627 = vunpack.c.l.b16 %v499
    %v628 = vunpack.c.l.b16 %v500
    %v629 = vunpack.c.l.b16 %v501
    %v630 = vunpack.c.l.b16 %v502
    %v631 = vunpack.c.l.b16 %v503
    %v632 = vunpack.c.l.b16 %v504
    %v633 = vunpack.c.l.b16 %v505
    %v634 = vunpack.c.l.b16 %v506
    %v635 = vunpack.c.l.b16 %v507
    %v636 = vunpack.c.l.b16 %v508
    %v637 = vunpack.c.l.b16 %v509
    %v638 = vunpack.c.l.b16 %v510
    %v639 = vpack.c.b16 %v576, %v575
    %v640 = vpack.c.b16 %v578, %v577
    %v641 = vpack.c.b16 %v580, %v579
    %v642 = vpack.c.b16 %v582, %v581
    %v643 = vpack.c.b16 %v584, %v583
    %v644 = vpack.c.b16 %v586, %v585
    %v645 = vpack.c.b16 %v588, %v587
    %v646 = vpack.c.b16 %v590, %v589
    %v647 = vpack.c.b16 %v592, %v591
    %v648 = vpack.c.b16 %v594, %v593
    %v649 = vpack.c.b16 %v596, %v595
    %v650 = vpack.c.b16 %v598, %v597
    %v651 = vpack.c.b16 %v600, %v599
    %v652 = vpack.c.b16 %v602, %v601
    %v653 = vpack.c.b16 %v604, %v603
    %v654 = vpack.c.b16 %v606, %v605
    %v655 = vpack.c.b16 %v608, %v607
    %v656 = vpack.c.b16 %v610, %v609
    %v657 = vpack.c.b16 %v612, %v611
    %v658 = vpack.c.b16 %v614, %v613
    %v659 = vpack.c.b16 %v616, %v615
    %v660 = vpack.c.b16 %v618, %v617
    %v661 = vpack.c.b16 %v620, %v619
    %v662 = vpack.c.b16 %v622, %v621
    %v663 = vpack.c.b16 %v624, %v623
    %v664 = vpack.c.b16 %v626, %v625
    %v665 = vpack.c.b16 %v628, %v627
    %v666 = vpack.c.b16 %v630, %v629
    %v667 = vpack.c.b16 %v632, %v631
    %v668 = vpack.c.b16 %v634, %v633
    %v669 = vpack.c.b16 %v636, %v635
    %v670 = vpack.c.b16 %v638, %v637
    %703 = vmatprep.subr.bf16.mxu0 0
    %704 = vmatpush1.bf16.msra.mxu0 %v639
    %705 = vmatprep.subr.bf16.mxu0 0
    %706 = vmatpush1.bf16.msra.mxu0 %v640
    %707 = vmatprep.subr.bf16.mxu0 0
    %708 = vmatpush1.bf16.msra.mxu0 %v641
    %709 = vmatprep.subr.bf16.mxu0 0
    %710 = vmatpush1.bf16.msra.mxu0 %v642
    %711 = vmatprep.subr.bf16.mxu0 0
    %712 = vmatpush1.bf16.msra.mxu0 %v643
    %713 = vmatprep.subr.bf16.mxu0 0
    %714 = vmatpush1.bf16.msra.mxu0 %v644
    %715 = vmatprep.subr.bf16.mxu0 0
    %716 = vmatpush1.bf16.msra.mxu0 %v645
    %717 = vmatprep.subr.bf16.mxu0 0
    %718 = vmatpush1.bf16.msra.mxu0 %v646
    %719 = vmatprep.subr.bf16.mxu0 0
    %720 = vmatpush1.bf16.msra.mxu0 %v647
    %721 = vmatprep.subr.bf16.mxu0 0
    %722 = vmatpush1.bf16.msra.mxu0 %v648
    %723 = vmatprep.subr.bf16.mxu0 0
    %724 = vmatpush1.bf16.msra.mxu0 %v649
    %725 = vmatprep.subr.bf16.mxu0 0
    %726 = vmatpush1.bf16.msra.mxu0 %v650
    %727 = vmatprep.subr.bf16.mxu0 0
    %728 = vmatpush1.bf16.msra.mxu0 %v651
    %729 = vmatprep.subr.bf16.mxu0 0
    %730 = vmatpush1.bf16.msra.mxu0 %v652
    %731 = vmatprep.subr.bf16.mxu0 0
    %732 = vmatpush1.bf16.msra.mxu0 %v653
    %733 = vmatprep.subr.bf16.mxu0 0
    %734 = vmatpush1.bf16.msra.mxu0 %v654
    %735 = vmatprep.mubr.bf16.mxu0 %v444
    %736 = vmatmul.mubr.bf16.gmra.mrb[0].mxu0 %v443
    %v737 = vpop.f32.mrb[0].mxu0
    %v738 = vadd.f32 0.0, %v737
    %v739 = vpop.f32.mrb[0].mxu0
    %v740 = vpop.f32.mrb[0].mxu0
    %v741 = vadd.f32 0.0, %v740
    %v742 = vpop.f32.mrb[0].mxu0
    %743 = vdwg.mxu0
    %744 = vmatprep.subr.bf16.mxu0 0
    %745 = vmatpush1.bf16.msra.mxu0 %v655
    %746 = vmatprep.subr.bf16.mxu0 0
    %747 = vmatpush1.bf16.msra.mxu0 %v656
    %748 = vmatprep.subr.bf16.mxu0 0
    %749 = vmatpush1.bf16.msra.mxu0 %v657
    %750 = vmatprep.subr.bf16.mxu0 0
    %751 = vmatpush1.bf16.msra.mxu0 %v658
    %752 = vmatprep.subr.bf16.mxu0 0
    %753 = vmatpush1.bf16.msra.mxu0 %v659
    %754 = vmatprep.subr.bf16.mxu0 0
    %755 = vmatpush1.bf16.msra.mxu0 %v660
    %756 = vmatprep.subr.bf16.mxu0 0
    %757 = vmatpush1.bf16.msra.mxu0 %v661
    %758 = vmatprep.subr.bf16.mxu0 0
    %759 = vmatpush1.bf16.msra.mxu0 %v662
    %760 = vmatprep.subr.bf16.mxu0 0
    %761 = vmatpush1.bf16.msra.mxu0 %v663
    %762 = vmatprep.subr.bf16.mxu0 0
    %763 = vmatpush1.bf16.msra.mxu0 %v664
    %764 = vmatprep.subr.bf16.mxu0 0
    %765 = vmatpush1.bf16.msra.mxu0 %v665
    %766 = vmatprep.subr.bf16.mxu0 0
    %767 = vmatpush1.bf16.msra.mxu0 %v666
    %768 = vmatprep.subr.bf16.mxu0 0
    %769 = vmatpush1.bf16.msra.mxu0 %v667
    %770 = vmatprep.subr.bf16.mxu0 0
    %771 = vmatpush1.bf16.msra.mxu0 %v668
    %772 = vmatprep.subr.bf16.mxu0 0
    %773 = vmatpush1.bf16.msra.mxu0 %v669
    %774 = vmatprep.subr.bf16.mxu0 0
    %775 = vmatpush1.bf16.msra.mxu0 %v670
    %776 = vmatprep.mubr.bf16.mxu0 %v446
    %777 = vmatmul.mubr.bf16.gmra.mrb[0].mxu0 %v445
    %v778 = vpop.f32.mrb[0].mxu0
    %v779 = vadd.f32 %v738, %v778
    %v780 = vpop.f32.mrb[0].mxu0
    %v781 = vpop.f32.mrb[0].mxu0
    %v782 = vadd.f32 %v741, %v781
    %v783 = vpop.f32.mrb[0].mxu0
    %784 = vdwg.mxu0
    %785 = vst [vmem:[#allocation2] sm:$0xff] %v779
    %786 = vst [vmem:[#allocation2 + $0x8] sm:$0xff] %v782
    %v787 = vld [vmem:[#allocation2] sm:$0xff]
    %v788 = vld [vmem:[#allocation2 + $0x8] sm:$0xff]
    %v789 = vld [vmem:[%s4] sm:$0x1]
    %v791 = vlaneseq
    %v792 = vshrl.u32 %v791, 7
    %v793 = vsub.s32 0, %v792
    %v794 = vrot.slane %v789, %v793
    %v796 = vadd.f32 %v787, %v794
    %v797 = vadd.f32 %v788, %v794
    %798 = vst [vmem:[#allocation9] sm:$0xff] %v796
    %799 = vst [vmem:[#allocation9 + $0x8] sm:$0xff] %v797
    // Predicated region
    $region34: #{tpu_custom_call.1} parent=1 // pred_check
      _
    $region35: #{tpu_custom_call.1} parent=1 // pred_check_branch
      %801 = sbr.rel (0) target = $region37
    $region36: #{tpu_custom_call.1} parent=1 // pred_region
      %s803 = ssub.s32 256, 256
      %804 = vsyncadd [#allocation5], %s803
      %s805 = sshll.u32 [#allocation9], 4
      %s806 = int_to_ptr.vmem [resolvable:$true] %s805
      %811 = dma.vmem_to_hbm [thread:$0]  %s806, 256, %s5, [#allocation5], 128, 128, 8
    $region37: #{tpu_custom_call.1} parent=1 // pred_fallthru
      _
    // Predicated region
    $region38: #{tpu_custom_call.1} parent=1 // pred_check
      _
    $region39: #{tpu_custom_call.1} parent=1 // pred_check_branch
      %813 = sbr.rel (0) target = $region41
    $region40: #{tpu_custom_call.1} parent=1 // pred_region
      %814 = dma.done [#allocation5], 256
    $region41: #{tpu_custom_call.1} parent=1 // pred_fallthru
      _
    %815 = vsyncpa [#allocation4], 1
    %816 = vsyncpa [#allocation7], 1
    %817 = vsyncpa [#allocation5], 1

</llo_original>
